<compile_context>
chip_gen: v5e
topology: v5e:2x2
jax: 0.10.0
libtpu: 0.0.40
codegen_flags: <defaults>
</compile_context>

<pallas_src>
import functools

import jax
import jax.numpy as jnp
from jax import lax
from jax.experimental import pallas as pl
from jax.experimental.pallas import tpu as pltpu


def _round_up(x, m):
    return ((x + m - 1) // m) * m


def _cdiv(a, b):
    return -(-a // b)


def _vmem_capacity_bytes():
    # Trace-time hardware query; fall back to the smallest per-core VMEM
    # (v7x: 64 MiB) so the sizing below is always safe.
    try:
        return int(pltpu.get_tpu_info().vmem_capacity_bytes)
    except Exception:
        return 64 * 1024 * 1024


# --------------------------------------------------------------------------
# Fused kernel: projections + L2-normalize + (V,T) scores + softmax
# --------------------------------------------------------------------------
def _fused_sim_kernel(txt_ref, wt_ref, bt_ref, vid_ref, wv_ref, bv_ref, o_ref,
                      tcache_ref, *, scale, eps, n_text, mm_dtype):
    # Text branch is grid-invariant: compute it once per core (inner index 0)
    # and cache the normalized embeddings in VMEM scratch (mm_dtype).  With
    # ("parallel", "arbitrary") semantics each core revisits inner index 0 for
    # its outer indices, so the cache is always valid (at most one recompute
    # per outer index / core).
    @pl.when(pl.program_id(1) == 0)
    def _():
        t = jnp.dot(txt_ref[...], wt_ref[...],
                    preferred_element_type=jnp.float32) + bt_ref[...]
        # Clamping the squared norm at eps**2 == torch.max(norm, eps) on the norm.
        t = t * lax.rsqrt(jnp.maximum(jnp.sum(t * t, axis=1, keepdims=True),
                                      eps * eps))
        tcache_ref[...] = t.astype(tcache_ref.dtype)

    # Video branch for this tile: bf16 MXU matmul, f32 accumulation + epilogue.
    v = jnp.dot(vid_ref[...], wv_ref[...],
                preferred_element_type=jnp.float32) + bv_ref[...]
    v = v * lax.rsqrt(jnp.maximum(jnp.sum(v * v, axis=1, keepdims=True),
                                  eps * eps))

    # Scores directly in output (V, T) orientation: contract on the embed dim,
    # no in-kernel transpose of a materialized tile.
    s = lax.dot_general(v.astype(mm_dtype), tcache_ref[...],
                        dimension_numbers=(((1,), (1,)), ((), ())),
                        preferred_element_type=jnp.float32)     # (tv, t_p)

    # softmax(temp * (sim + 1) / 2) == softmax(0.5 * temp * sim): affine folded.
    s = s * scale

    if n_text < s.shape[1]:
        # Static check: mask padded text columns out of the softmax.
        col = lax.broadcasted_iota(jnp.int32, s.shape, 1)
        s = jnp.where(col < n_text, s, -jnp.inf)

    m = jnp.max(s, axis=1, keepdims=True)
    p = jnp.exp(s - m)
    denom = jnp.sum(p, axis=1, keepdims=True)
    o_ref[...] = (p * pl.reciprocal(denom, approx=True)).astype(o_ref.dtype)


def egovlp_similarity(text_feats, w_text, b_text, video_feats, w_vid, b_vid,
                      *, temp=1.0, eps=1e-8, mm_dtype=jnp.bfloat16,
                      out_dtype=jnp.bfloat16, video_tile=None):
    """softmax(temp * ((normalize(t W_t) @ normalize(v W_v).T + 1)/2).T, dim=1)."""
    n_text, dt = text_feats.shape
    n_video, dv = video_feats.shape
    e = w_text.shape[1]
    assert w_vid.shape[1] == e

    # Pad to TPU-friendly shapes.  Zero-padding is exact for the projections /
    # norms; padded text columns are masked before the softmax and padded
    # video rows are sliced off at the end.
    dt_p = _round_up(dt, 128)
    dv_p = _round_up(dv, 128)
    e_p = _round_up(e, 128)
    t_p = _round_up(n_text, 128)          # lane axis of the (V, T) output

    mm_b = jnp.dtype(mm_dtype).itemsize
    out_b = jnp.dtype(out_dtype).itemsize

    # --- VMEM budget, re-derived per chip (64 MiB on v7x, 128 MiB v5e/v6e) ---
    vmem_cap = _vmem_capacity_bytes()
    budget = (vmem_cap * 7) // 8
    if video_tile is None:
        video_tile = 512 if vmem_cap >= 96 * 1024 * 1024 else 256
    # Single-buffered invariants + normalized-text cache scratch.
    fixed_vmem = (t_p * dt_p * mm_b        # text feats
                  + dt_p * e_p * mm_b      # w_text
                  + dv_p * e_p * mm_b      # w_vid
                  + 2 * 8 * e_p * 4        # biases (sublane-padded, f32)
                  + t_p * e_p * mm_b)      # normalized-text cache
    # Double-buffered per-video-row tiles (input activation + output probs).
    per_row_vmem = 2 * (dv_p * mm_b + t_p * out_b)
    # TODO(synk): for MIR-scale text counts (fixed_vmem near the budget) a
    # second text-tile grid axis with an online softmax is needed; here the
    # text set is assumed VMEM-resident.
    avail_rows = max(8, (budget - fixed_vmem - (2 << 20)) // per_row_vmem)
    video_tile = max(8, min(int(video_tile), int(avail_rows)))

    # --- video tiling: >= 2 balanced tiles whenever possible so the
    # "parallel" axis shards across both v7x TensorCores, with minimal
    # padding of video rows ---
    v_p = _round_up(n_video, 8)
    want_tiles = _cdiv(v_p, _round_up(video_tile, 8))
    if v_p > 8:
        want_tiles = max(want_tiles, 2)
    tv = _round_up(_cdiv(v_p, want_tiles), 8)
    n_tiles = _cdiv(v_p, tv)
    if n_tiles > 1:
        n_outer, n_inner = 2, _cdiv(n_tiles, 2)
    else:
        n_outer, n_inner = 1, 1
    v_p = n_outer * n_inner * tv

    vmem_limit = int(min(budget,
                         max(32 << 20, fixed_vmem + per_row_vmem * tv + (8 << 20))))

    f32 = jnp.float32
    # Matmul operands cast to bf16 on the host side (half the DMA bytes);
    # biases stay f32 (f32 accumulation via preferred_element_type).
    txt = jnp.pad(text_feats.astype(mm_dtype), ((0, t_p - n_text), (0, dt_p - dt)))
    vid = jnp.pad(video_feats.astype(mm_dtype), ((0, v_p - n_video), (0, dv_p - dv)))
    wt = jnp.pad(w_text.astype(mm_dtype), ((0, dt_p - dt), (0, e_p - e)))
    wv = jnp.pad(w_vid.astype(mm_dtype), ((0, dv_p - dv), (0, e_p - e)))
    bt = jnp.pad(b_text.astype(f32).reshape(1, e), ((0, 0), (0, e_p - e)))
    bv = jnp.pad(b_vid.astype(f32).reshape(1, e), ((0, 0), (0, e_p - e)))

    kern = functools.partial(_fused_sim_kernel,
                             scale=0.5 * float(temp), eps=float(eps),
                             n_text=int(n_text), mm_dtype=mm_dtype)

    def build(invariant_mode):
        def inv(shape):
            # Grid-invariant operands: no point double-buffering a block whose
            # index never changes.
            return pl.BlockSpec(shape, lambda i, j: (0, 0),
                                pipeline_mode=invariant_mode)

        return pl.pallas_call(
            kern,
            out_shape=jax.ShapeDtypeStruct((v_p, t_p), out_dtype),
            grid=(n_outer, n_inner),
            in_specs=[
                inv((t_p, dt_p)),                                  # text feats
                inv((dt_p, e_p)),                                  # w_text
                inv((1, e_p)),                                     # b_text
                pl.BlockSpec((tv, dv_p),
                             lambda i, j: (i * n_inner + j, 0)),   # video tile
                inv((dv_p, e_p)),                                  # w_vid
                inv((1, e_p)),                                     # b_vid
            ],
            out_specs=pl.BlockSpec((tv, t_p),
                                   lambda i, j: (i * n_inner + j, 0)),
            scratch_shapes=[pltpu.VMEM((t_p, e_p), mm_dtype)],     # text cache
            compiler_params=pltpu.CompilerParams(
                dimension_semantics=("parallel", "arbitrary"),
                vmem_limit_bytes=vmem_limit),
        )

    try:
        out = build(pl.Buffered(buffer_count=1))(txt, wt, bt, vid, wv, bv)
    except Exception:
        # Pallas version without per-spec pipeline_mode support: fall back to
        # default (double-buffered) invariants — correctness is unchanged.
        out = build(None)(txt, wt, bt, vid, wv, bv)

    return out[:n_video, :n_text]


# --------------------------------------------------------------------------
# Standalone projection kernel (return_sim=False path only)
# --------------------------------------------------------------------------
def _linear_kernel(x_ref, w_ref, b_ref, o_ref):
    o_ref[...] = (jnp.dot(x_ref[...], w_ref[...],
                          preferred_element_type=jnp.float32)
                  + b_ref[...]).astype(o_ref.dtype)


def linear(x, w, b, *, mm_dtype=jnp.bfloat16, out_dtype=jnp.float32,
           row_tile=256):
    """Row-tiled projection head: y = x @ w + b (bf16 MXU, f32 accumulation)."""
    n, d = x.shape
    dout = w.shape[1]
    d_p = _round_up(d, 128)
    e_p = _round_up(dout, 128)
    tv = min(_round_up(int(row_tile), 8), _round_up(n, 8))
    n_p = _round_up(n, tv)

    xp = jnp.pad(x.astype(mm_dtype), ((0, n_p - n), (0, d_p - d)))
    wp = jnp.pad(w.astype(mm_dtype), ((0, d_p - d), (0, e_p - dout)))
    bp = jnp.pad(b.astype(jnp.float32).reshape(1, dout), ((0, 0), (0, e_p - dout)))

    out = pl.pallas_call(
        _linear_kernel,
        out_shape=jax.ShapeDtypeStruct((n_p, e_p), out_dtype),
        grid=(n_p // tv,),
        in_specs=[pl.BlockSpec((tv, d_p), lambda i: (i, 0)),
                  pl.BlockSpec((d_p, e_p), lambda i: (0, 0)),
                  pl.BlockSpec((1, e_p), lambda i: (0, 0))],
        out_specs=pl.BlockSpec((tv, e_p), lambda i: (i, 0)),
        compiler_params=pltpu.CompilerParams(
            dimension_semantics=("parallel",)),
    )(xp, wp, bp)
    return out[:n, :dout]


# --------------------------------------------------------------------------
# EgoVLP wrapper
# --------------------------------------------------------------------------
class EgoVLPPallas:
    def __init__(self, text_feat_dim=32, vid_feat_dim=32, embed_dim=32,
                 key=jax.random.PRNGKey(0), mm_dtype=jnp.bfloat16,
                 out_dtype=jnp.bfloat16):
        # TODO(synk): the pretrained SpaceTimeTransformer video backbone and
        # DistilBERT text backbone (checkpoint `epic_mir_plus.pth`) have no
        # clean in-script equivalent; they are modeled by their "minimal"
        # projection heads only, with deterministic synthetic weights.
        k1, k2 = jax.random.split(key, 2)
        scale = 0.02
        self.w_text = (scale * jax.random.normal(k1, (text_feat_dim, embed_dim))
                       ).astype(jnp.float32)
        self.b_text = jnp.zeros((embed_dim,), jnp.float32)
        self.w_vid = (scale * jax.random.normal(k2, (vid_feat_dim, embed_dim))
                      ).astype(jnp.float32)
        self.b_vid = jnp.zeros((embed_dim,), jnp.float32)
        self.mm_dtype = mm_dtype
        self.out_dtype = out_dtype

    def forward(self, video_feats, text_feats, return_sim=True):
        if return_sim:
            # Fully fused: projections + similarity + softmax in one kernel.
            return egovlp_similarity(text_feats, self.w_text, self.b_text,
                                     video_feats, self.w_vid, self.b_vid,
                                     temp=1.0, mm_dtype=self.mm_dtype,
                                     out_dtype=self.out_dtype)
        text_embed = linear(text_feats, self.w_text, self.b_text,
                            mm_dtype=self.mm_dtype)              # (T, E)
        vid_embed = linear(video_feats, self.w_vid, self.b_vid,
                           mm_dtype=self.mm_dtype)               # (V, E)
        return vid_embed, text_embed

    def similarity(self, z_text, z_video, temp=1.0):
        # Identity projection -> the fused kernel reduces to the original
        # similarity(): normalize, score, softmax.
        e = z_text.shape[1]
        eye = jnp.eye(e, dtype=jnp.float32)
        zb = jnp.zeros((e,), jnp.float32)
        return egovlp_similarity(z_text, eye, zb, z_video, eye, zb,
                                 temp=temp, mm_dtype=self.mm_dtype,
                                 out_dtype=self.out_dtype)


# --------------------------------------------------------------------------
# Reference (pure JAX, f32) for a sanity check
# --------------------------------------------------------------------------
def _reference(text_feats, video_feats, w_t, b_t, w_v, b_v, temp=1.0, eps=1e-8):
    t = text_feats @ w_t + b_t
    v = video_feats @ w_v + b_v
    t = t / jnp.maximum(jnp.linalg.norm(t, axis=1, keepdims=True), eps)
    v = v / jnp.maximum(jnp.linalg.norm(v, axis=1, keepdims=True), eps)
    sim = (t @ v.T + 1.0) / 2.0
    return jax.nn.softmax(temp * sim.T, axis=1)


if __name__ == "__main__":
    key = jax.random.PRNGKey(0)
    k_txt, k_vid, k_txt2, k_vid2 = jax.random.split(key, 4)

    n_text, n_video = 4, 2
    text_feat_dim = vid_feat_dim = embed_dim = 32

    # Synthetic pooled backbone features (stand-ins for DistilBERT [CLS] and
    # SpaceTimeTransformer pooled video tokens).
    text_feats = jax.random.normal(k_txt, (n_text, text_feat_dim), jnp.float32)
    video_feats = jax.random.normal(k_vid, (n_video, vid_feat_dim), jnp.float32)

    model = EgoVLPPallas(text_feat_dim, vid_feat_dim, embed_dim)
    sim = model.forward(video_feats, text_feats, return_sim=True)
    sim = jax.block_until_ready(sim)

    assert sim.shape == (n_video, n_text)
    # softmax rows of the (video x text) score matrix must sum to 1
    # (bf16 output + approximate EUP reciprocal -> small tolerance)
    row_sums = jnp.sum(sim.astype(jnp.float32), axis=1)
    assert bool(jnp.allclose(row_sums, 1.0, atol=2e-2))

    # agree with the pure-JAX f32 reference (bf16 MXU inputs / bf16 output)
    ref = _reference(text_feats, video_feats, model.w_text, model.b_text,
                     model.w_vid, model.b_vid)
    assert bool(jnp.allclose(sim.astype(jnp.float32), ref, atol=5e-2))

    # Multi-tile path: forces grid=(2, 3) so the cached-text branch, the
    # parallel outer axis and the text-column mask are all exercised.
    n_text2, n_video2 = 10, 40
    text2 = jax.random.normal(k_txt2, (n_text2, text_feat_dim), jnp.float32)
    video2 = jax.random.normal(k_vid2, (n_video2, vid_feat_dim), jnp.float32)
    sim2 = egovlp_similarity(text2, model.w_text, model.b_text,
                             video2, model.w_vid, model.b_vid,
                             temp=1.0, video_tile=8)
    sim2 = jax.block_until_ready(sim2)
    assert sim2.shape == (n_video2, n_text2)
    ref2 = _reference(text2, video2, model.w_text, model.b_text,
                      model.w_vid, model.b_vid)
    assert bool(jnp.allclose(sim2.astype(jnp.float32), ref2, atol=5e-2))

    # return_sim=False path (standalone row-tiled projection kernel)
    vz, tz = model.forward(video_feats, text_feats, return_sim=False)
    vz, tz = jax.block_until_ready((vz, tz))
    assert vz.shape == (n_video, embed_dim) and tz.shape == (n_text, embed_dim)

    print("KERNEL_OK")
</pallas_src>

<mosaic_0001>
module attributes {stable_mosaic.version = 11 : i64} {
  func.func @_fused_sim_kernel(%arg0: i32, %arg1: i32, %arg2: memref<128x128xbf16, #tpu.memory_space<vmem>>, %arg3: memref<128x128xbf16, #tpu.memory_space<vmem>>, %arg4: memref<1x128xf32, #tpu.memory_space<vmem>>, %arg5: memref<8x128xbf16, #tpu.memory_space<vmem>>, %arg6: memref<128x128xbf16, #tpu.memory_space<vmem>>, %arg7: memref<1x128xf32, #tpu.memory_space<vmem>>, %arg8: memref<8x128xbf16, #tpu.memory_space<vmem>>, %arg9: memref<128x128xbf16, #tpu.memory_space<vmem>>) attributes {dimension_semantics = [#tpu.dimension_semantics<parallel>, #tpu.dimension_semantics<arbitrary>], iteration_bounds = array<i64: 1, 1>, scalar_prefetch = 0 : i64, scratch_operands = 1 : i64, tpu.core_type = #tpu.core_type<tc>, window_params = [{pipeline_mode = #tpu.pipeline_mode<synchronous>, transform_indices = @transform_0, window_bounds = array<i64: 128, 128>}, {pipeline_mode = #tpu.pipeline_mode<synchronous>, transform_indices = @transform_1, window_bounds = array<i64: 128, 128>}, {pipeline_mode = #tpu.pipeline_mode<synchronous>, transform_indices = @transform_2, window_bounds = array<i64: 1, 128>}, {transform_indices = @transform_3, window_bounds = array<i64: 8, 128>}, {pipeline_mode = #tpu.pipeline_mode<synchronous>, transform_indices = @transform_4, window_bounds = array<i64: 128, 128>}, {pipeline_mode = #tpu.pipeline_mode<synchronous>, transform_indices = @transform_5, window_bounds = array<i64: 1, 128>}, {transform_indices = @transform_6, window_bounds = array<i64: 8, 128>}]} {
    %c0_i32 = arith.constant 0 : i32
    %0 = arith.cmpi eq, %arg1, %c0_i32 : i32
    %1 = arith.extui %0 : i1 to i32
    %c0_i32_0 = arith.constant 0 : i32
    %2 = arith.cmpi ne, %1, %c0_i32_0 : i32
    scf.if %2 {
      %c0_17 = arith.constant 0 : index
      %c0_18 = arith.constant 0 : index
      %39 = vector.load %arg2[%c0_17, %c0_18] : memref<128x128xbf16, #tpu.memory_space<vmem>>, vector<128x128xbf16>
      %c0_19 = arith.constant 0 : index
      %c0_20 = arith.constant 0 : index
      %40 = vector.load %arg3[%c0_19, %c0_20] : memref<128x128xbf16, #tpu.memory_space<vmem>>, vector<128x128xbf16>
      %cst_21 = arith.constant dense<0.000000e+00> : vector<128x128xf32>
      %41 = tpu.matmul %39, %40, %cst_21 {dimension_numbers = #tpu.dot_dimension_numbers<[1], [0], [0], [1], [0, 0, 1, 1], [], []>} : vector<128x128xbf16>, vector<128x128xbf16>, vector<128x128xf32> -> vector<128x128xf32>
      %c0_22 = arith.constant 0 : index
      %c0_23 = arith.constant 0 : index
      %42 = vector.load %arg4[%c0_22, %c0_23] : memref<1x128xf32, #tpu.memory_space<vmem>>, vector<1x128xf32>
      %43 = vector.broadcast %42 : vector<1x128xf32> to vector<128x128xf32>
      %44 = arith.addf %41, %43 : vector<128x128xf32>
      %45 = arith.mulf %44, %44 : vector<128x128xf32>
      %cst_24 = arith.constant dense<0.000000e+00> : vector<128xf32>
      %46 = vector.multi_reduction <add>, %45, %cst_24 [1] : vector<128x128xf32> to vector<128xf32>
      %47 = vector.shape_cast %46 : vector<128xf32> to vector<128x1xf32>
      %cst_25 = arith.constant 1.000000e-16 : f32
      %48 = vector.broadcast %cst_25 : f32 to vector<128x1xf32>
      %49 = arith.maximumf %47, %48 : vector<128x1xf32>
      %50 = math.rsqrt %49 : vector<128x1xf32>
      %51 = vector.broadcast %50 : vector<128x1xf32> to vector<128x128xf32>
      %52 = arith.mulf %44, %51 : vector<128x128xf32>
      %53 = arith.truncf %52 : vector<128x128xf32> to vector<128x128xbf16>
      %c0_26 = arith.constant 0 : index
      %c0_27 = arith.constant 0 : index
      %54 = vector.load %arg9[%c0_26, %c0_27] : memref<128x128xbf16, #tpu.memory_space<vmem>>, vector<128x128xbf16>
      tpu.vector_store %arg9[%c0_26, %c0_27], %53 {strides = array<i32>} : memref<128x128xbf16, #tpu.memory_space<vmem>>, vector<128x128xbf16>,
    } else {
    }
    %c0 = arith.constant 0 : index
    %c0_1 = arith.constant 0 : index
    %3 = vector.load %arg5[%c0, %c0_1] : memref<8x128xbf16, #tpu.memory_space<vmem>>, vector<8x128xbf16>
    %c0_2 = arith.constant 0 : index
    %c0_3 = arith.constant 0 : index
    %4 = vector.load %arg6[%c0_2, %c0_3] : memref<128x128xbf16, #tpu.memory_space<vmem>>, vector<128x128xbf16>
    %cst = arith.constant dense<0.000000e+00> : vector<8x128xf32>
    %5 = tpu.matmul %3, %4, %cst {dimension_numbers = #tpu.dot_dimension_numbers<[1], [0], [0], [1], [0, 0, 1, 1], [], []>} : vector<8x128xbf16>, vector<128x128xbf16>, vector<8x128xf32> -> vector<8x128xf32>
    %c0_4 = arith.constant 0 : index
    %c0_5 = arith.constant 0 : index
    %6 = vector.load %arg7[%c0_4, %c0_5] : memref<1x128xf32, #tpu.memory_space<vmem>>, vector<1x128xf32>
    %7 = vector.broadcast %6 : vector<1x128xf32> to vector<8x128xf32>
    %8 = arith.addf %5, %7 : vector<8x128xf32>
    %9 = arith.mulf %8, %8 : vector<8x128xf32>
    %cst_6 = arith.constant dense<0.000000e+00> : vector<8xf32>
    %10 = vector.multi_reduction <add>, %9, %cst_6 [1] : vector<8x128xf32> to vector<8xf32>
    %11 = vector.shape_cast %10 : vector<8xf32> to vector<8x1xf32>
    %cst_7 = arith.constant 1.000000e-16 : f32
    %12 = vector.broadcast %cst_7 : f32 to vector<8x1xf32>
    %13 = arith.maximumf %11, %12 : vector<8x1xf32>
    %14 = math.rsqrt %13 : vector<8x1xf32>
    %15 = vector.broadcast %14 : vector<8x1xf32> to vector<8x128xf32>
    %16 = arith.mulf %8, %15 : vector<8x128xf32>
    %17 = arith.truncf %16 : vector<8x128xf32> to vector<8x128xbf16>
    %c0_8 = arith.constant 0 : index
    %c0_9 = arith.constant 0 : index
    %18 = vector.load %arg9[%c0_8, %c0_9] : memref<128x128xbf16, #tpu.memory_space<vmem>>, vector<128x128xbf16>
    %cst_10 = arith.constant dense<0.000000e+00> : vector<8x128xf32>
    %19 = tpu.matmul %17, %18, %cst_10 {dimension_numbers = #tpu.dot_dimension_numbers<[1], [1], [0], [0], [0, 0, 1, 0], [], []>} : vector<8x128xbf16>, vector<128x128xbf16>, vector<8x128xf32> -> vector<8x128xf32>
    %cst_11 = arith.constant 5.000000e-01 : f32
    %20 = vector.broadcast %cst_11 : f32 to vector<8x128xf32>
    %21 = arith.mulf %19, %20 : vector<8x128xf32>
    %22 = tpu.iota {dimensions = array<i32: 1>} : vector<8x128xi32>
    %c4_i32 = arith.constant 4 : i32
    %23 = vector.broadcast %c4_i32 : i32 to vector<8x128xi32>
    %24 = arith.cmpi slt, %22, %23 : vector<8x128xi32>
    %cst_12 = arith.constant 0xFF800000 : f32
    %25 = vector.broadcast %cst_12 : f32 to vector<8x128xf32>
    %26 = arith.select %24, %21, %25 : vector<8x128xi1>, vector<8x128xf32>
    %cst_13 = arith.constant dense<0xFF800000> : vector<8xf32>
    %27 = vector.multi_reduction <maximumf>, %26, %cst_13 [1] : vector<8x128xf32> to vector<8xf32>
    %28 = vector.shape_cast %27 : vector<8xf32> to vector<8x1xf32>
    %29 = vector.broadcast %28 : vector<8x1xf32> to vector<8x128xf32>
    %30 = arith.subf %26, %29 : vector<8x128xf32>
    %31 = math.exp %30 : vector<8x128xf32>
    %cst_14 = arith.constant dense<0.000000e+00> : vector<8xf32>
    %32 = vector.multi_reduction <add>, %31, %cst_14 [1] : vector<8x128xf32> to vector<8xf32>
    %33 = vector.shape_cast %32 : vector<8xf32> to vector<8x1xf32>
    %34 = tpu.reciprocal %33 {approx = true} : vector<8x1xf32> -> vector<8x1xf32>
    %35 = vector.broadcast %34 : vector<8x1xf32> to vector<8x128xf32>
    %36 = arith.mulf %31, %35 : vector<8x128xf32>
    %37 = arith.truncf %36 : vector<8x128xf32> to vector<8x128xbf16>
    %c0_15 = arith.constant 0 : index
    %c0_16 = arith.constant 0 : index
    %38 = vector.load %arg8[%c0_15, %c0_16] : memref<8x128xbf16, #tpu.memory_space<vmem>>, vector<8x128xbf16>
    tpu.vector_store %arg8[%c0_15, %c0_16], %37 {strides = array<i32>} : memref<8x128xbf16, #tpu.memory_space<vmem>>, vector<8x128xbf16>,
    return
  }
  func.func @transform_0(%arg0: i32, %arg1: i32) -> (i32, i32) {
    %c0_i32 = arith.constant 0 : i32
    %c0_i32_0 = arith.constant 0 : i32
    %c0_i32_1 = arith.constant 0 : i32
    return %c0_i32, %c0_i32_0 : i32, i32
  }
  func.func @transform_1(%arg0: i32, %arg1: i32) -> (i32, i32) {
    %c0_i32 = arith.constant 0 : i32
    %c0_i32_0 = arith.constant 0 : i32
    %c0_i32_1 = arith.constant 0 : i32
    return %c0_i32, %c0_i32_0 : i32, i32
  }
  func.func @transform_2(%arg0: i32, %arg1: i32) -> (i32, i32) {
    %c0_i32 = arith.constant 0 : i32
    %c0_i32_0 = arith.constant 0 : i32
    %c0_i32_1 = arith.constant 0 : i32
    return %c0_i32, %c0_i32_0 : i32, i32
  }
  func.func @transform_3(%arg0: i32, %arg1: i32) -> (i32, i32) {
    %c1_i32 = arith.constant 1 : i32
    %0 = arith.muli %arg0, %c1_i32 : i32
    %1 = arith.addi %0, %arg1 : i32
    %c0_i32 = arith.constant 0 : i32
    %c0_i32_0 = arith.constant 0 : i32
    return %1, %c0_i32 : i32, i32
  }
  func.func @transform_4(%arg0: i32, %arg1: i32) -> (i32, i32) {
    %c0_i32 = arith.constant 0 : i32
    %c0_i32_0 = arith.constant 0 : i32
    %c0_i32_1 = arith.constant 0 : i32
    return %c0_i32, %c0_i32_0 : i32, i32
  }
  func.func @transform_5(%arg0: i32, %arg1: i32) -> (i32, i32) {
    %c0_i32 = arith.constant 0 : i32
    %c0_i32_0 = arith.constant 0 : i32
    %c0_i32_1 = arith.constant 0 : i32
    return %c0_i32, %c0_i32_0 : i32, i32
  }
  func.func @transform_6(%arg0: i32, %arg1: i32) -> (i32, i32) {
    %c1_i32 = arith.constant 1 : i32
    %0 = arith.muli %arg0, %c1_i32 : i32
    %1 = arith.addi %0, %arg1 : i32
    %c0_i32 = arith.constant 0 : i32
    %c0_i32_0 = arith.constant 0 : i32
    return %1, %c0_i32 : i32, i32
  }
}

module attributes {stable_mosaic.version = 11 : i64} {
  func.func @_fused_sim_kernel(%arg0: i32, %arg1: i32, %arg2: memref<128x128xbf16, #tpu.memory_space<vmem>>, %arg3: memref<128x128xbf16, #tpu.memory_space<vmem>>, %arg4: memref<1x128xf32, #tpu.memory_space<vmem>>, %arg5: memref<8x128xbf16, #tpu.memory_space<vmem>>, %arg6: memref<128x128xbf16, #tpu.memory_space<vmem>>, %arg7: memref<1x128xf32, #tpu.memory_space<vmem>>, %arg8: memref<8x128xbf16, #tpu.memory_space<vmem>>, %arg9: memref<128x128xbf16, #tpu.memory_space<vmem>>) attributes {dimension_semantics = [#tpu.dimension_semantics<parallel>, #tpu.dimension_semantics<arbitrary>], iteration_bounds = array<i64: 1, 1>, scalar_prefetch = 0 : i64, scratch_operands = 1 : i64, tpu.core_type = #tpu.core_type<tc>, window_params = [{pipeline_mode = #tpu.pipeline_mode<synchronous>, transform_indices = @transform_0, window_bounds = array<i64: 128, 128>}, {pipeline_mode = #tpu.pipeline_mode<synchronous>, transform_indices = @transform_1, window_bounds = array<i64: 128, 128>}, {pipeline_mode = #tpu.pipeline_mode<synchronous>, transform_indices = @transform_2, window_bounds = array<i64: 1, 128>}, {transform_indices = @transform_3, window_bounds = array<i64: 8, 128>}, {pipeline_mode = #tpu.pipeline_mode<synchronous>, transform_indices = @transform_4, window_bounds = array<i64: 128, 128>}, {pipeline_mode = #tpu.pipeline_mode<synchronous>, transform_indices = @transform_5, window_bounds = array<i64: 1, 128>}, {transform_indices = @transform_6, window_bounds = array<i64: 8, 128>}]} {
    %c0_i32 = arith.constant 0 : i32
    %0 = arith.cmpi eq, %arg1, %c0_i32 : i32
    %1 = arith.extui %0 : i1 to i32
    %c0_i32_0 = arith.constant 0 : i32
    %2 = arith.cmpi ne, %1, %c0_i32_0 : i32
    scf.if %2 {
      %c0_17 = arith.constant 0 : index
      %c0_18 = arith.constant 0 : index
      %39 = vector.load %arg2[%c0_17, %c0_18] : memref<128x128xbf16, #tpu.memory_space<vmem>>, vector<128x128xbf16>
      %c0_19 = arith.constant 0 : index
      %c0_20 = arith.constant 0 : index
      %40 = vector.load %arg3[%c0_19, %c0_20] : memref<128x128xbf16, #tpu.memory_space<vmem>>, vector<128x128xbf16>
      %cst_21 = arith.constant dense<0.000000e+00> : vector<128x128xf32>
      %41 = tpu.matmul %39, %40, %cst_21 {dimension_numbers = #tpu.dot_dimension_numbers<[1], [0], [0], [1], [0, 0, 1, 1], [], []>} : vector<128x128xbf16>, vector<128x128xbf16>, vector<128x128xf32> -> vector<128x128xf32>
      %c0_22 = arith.constant 0 : index
      %c0_23 = arith.constant 0 : index
      %42 = vector.load %arg4[%c0_22, %c0_23] : memref<1x128xf32, #tpu.memory_space<vmem>>, vector<1x128xf32>
      %43 = vector.broadcast %42 : vector<1x128xf32> to vector<128x128xf32>
      %44 = arith.addf %41, %43 : vector<128x128xf32>
      %45 = arith.mulf %44, %44 : vector<128x128xf32>
      %cst_24 = arith.constant dense<0.000000e+00> : vector<128xf32>
      %46 = vector.multi_reduction <add>, %45, %cst_24 [1] : vector<128x128xf32> to vector<128xf32>
      %47 = vector.shape_cast %46 : vector<128xf32> to vector<128x1xf32>
      %cst_25 = arith.constant 1.000000e-16 : f32
      %48 = vector.broadcast %cst_25 : f32 to vector<128x1xf32>
      %49 = arith.maximumf %47, %48 : vector<128x1xf32>
      %50 = math.rsqrt %49 : vector<128x1xf32>
      %51 = vector.broadcast %50 : vector<128x1xf32> to vector<128x128xf32>
      %52 = arith.mulf %44, %51 : vector<128x128xf32>
      %53 = arith.truncf %52 : vector<128x128xf32> to vector<128x128xbf16>
      %c0_26 = arith.constant 0 : index
      %c0_27 = arith.constant 0 : index
      %54 = vector.load %arg9[%c0_26, %c0_27] : memref<128x128xbf16, #tpu.memory_space<vmem>>, vector<128x128xbf16>
      tpu.vector_store %arg9[%c0_26, %c0_27], %53 {strides = array<i32>} : memref<128x128xbf16, #tpu.memory_space<vmem>>, vector<128x128xbf16>,
    } else {
    }
    %c0 = arith.constant 0 : index
    %c0_1 = arith.constant 0 : index
    %3 = vector.load %arg5[%c0, %c0_1] : memref<8x128xbf16, #tpu.memory_space<vmem>>, vector<8x128xbf16>
    %c0_2 = arith.constant 0 : index
    %c0_3 = arith.constant 0 : index
    %4 = vector.load %arg6[%c0_2, %c0_3] : memref<128x128xbf16, #tpu.memory_space<vmem>>, vector<128x128xbf16>
    %cst = arith.constant dense<0.000000e+00> : vector<8x128xf32>
    %5 = tpu.matmul %3, %4, %cst {dimension_numbers = #tpu.dot_dimension_numbers<[1], [0], [0], [1], [0, 0, 1, 1], [], []>} : vector<8x128xbf16>, vector<128x128xbf16>, vector<8x128xf32> -> vector<8x128xf32>
    %c0_4 = arith.constant 0 : index
    %c0_5 = arith.constant 0 : index
    %6 = vector.load %arg7[%c0_4, %c0_5] : memref<1x128xf32, #tpu.memory_space<vmem>>, vector<1x128xf32>
    %7 = vector.broadcast %6 : vector<1x128xf32> to vector<8x128xf32>
    %8 = arith.addf %5, %7 : vector<8x128xf32>
    %9 = arith.mulf %8, %8 : vector<8x128xf32>
    %cst_6 = arith.constant dense<0.000000e+00> : vector<8xf32>
    %10 = vector.multi_reduction <add>, %9, %cst_6 [1] : vector<8x128xf32> to vector<8xf32>
    %11 = vector.shape_cast %10 : vector<8xf32> to vector<8x1xf32>
    %cst_7 = arith.constant 1.000000e-16 : f32
    %12 = vector.broadcast %cst_7 : f32 to vector<8x1xf32>
    %13 = arith.maximumf %11, %12 : vector<8x1xf32>
    %14 = math.rsqrt %13 : vector<8x1xf32>
    %15 = vector.broadcast %14 : vector<8x1xf32> to vector<8x128xf32>
    %16 = arith.mulf %8, %15 : vector<8x128xf32>
    %17 = arith.truncf %16 : vector<8x128xf32> to vector<8x128xbf16>
    %c0_8 = arith.constant 0 : index
    %c0_9 = arith.constant 0 : index
    %18 = vector.load %arg9[%c0_8, %c0_9] : memref<128x128xbf16, #tpu.memory_space<vmem>>, vector<128x128xbf16>
    %cst_10 = arith.constant dense<0.000000e+00> : vector<8x128xf32>
    %19 = tpu.matmul %17, %18, %cst_10 {dimension_numbers = #tpu.dot_dimension_numbers<[1], [1], [0], [0], [0, 0, 1, 0], [], []>} : vector<8x128xbf16>, vector<128x128xbf16>, vector<8x128xf32> -> vector<8x128xf32>
    %cst_11 = arith.constant 5.000000e-01 : f32
    %20 = vector.broadcast %cst_11 : f32 to vector<8x128xf32>
    %21 = arith.mulf %19, %20 : vector<8x128xf32>
    %22 = tpu.iota {dimensions = array<i32: 1>} : vector<8x128xi32>
    %c4_i32 = arith.constant 4 : i32
    %23 = vector.broadcast %c4_i32 : i32 to vector<8x128xi32>
    %24 = arith.cmpi slt, %22, %23 : vector<8x128xi32>
    %cst_12 = arith.constant 0xFF800000 : f32
    %25 = vector.broadcast %cst_12 : f32 to vector<8x128xf32>
    %26 = arith.select %24, %21, %25 : vector<8x128xi1>, vector<8x128xf32>
    %cst_13 = arith.constant dense<0xFF800000> : vector<8xf32>
    %27 = vector.multi_reduction <maximumf>, %26, %cst_13 [1] : vector<8x128xf32> to vector<8xf32>
    %28 = vector.shape_cast %27 : vector<8xf32> to vector<8x1xf32>
    %29 = vector.broadcast %28 : vector<8x1xf32> to vector<8x128xf32>
    %30 = arith.subf %26, %29 : vector<8x128xf32>
    %31 = math.exp %30 : vector<8x128xf32>
    %cst_14 = arith.constant dense<0.000000e+00> : vector<8xf32>
    %32 = vector.multi_reduction <add>, %31, %cst_14 [1] : vector<8x128xf32> to vector<8xf32>
    %33 = vector.shape_cast %32 : vector<8xf32> to vector<8x1xf32>
    %34 = tpu.reciprocal %33 {approx = true} : vector<8x1xf32> -> vector<8x1xf32>
    %35 = vector.broadcast %34 : vector<8x1xf32> to vector<8x128xf32>
    %36 = arith.mulf %31, %35 : vector<8x128xf32>
    %37 = arith.truncf %36 : vector<8x128xf32> to vector<8x128xbf16>
    %c0_15 = arith.constant 0 : index
    %c0_16 = arith.constant 0 : index
    %38 = vector.load %arg8[%c0_15, %c0_16] : memref<8x128xbf16, #tpu.memory_space<vmem>>, vector<8x128xbf16>
    tpu.vector_store %arg8[%c0_15, %c0_16], %37 {strides = array<i32>} : memref<8x128xbf16, #tpu.memory_space<vmem>>, vector<8x128xbf16>,
    return
  }
  func.func @transform_0(%arg0: i32, %arg1: i32) -> (i32, i32) {
    %c0_i32 = arith.constant 0 : i32
    %c0_i32_0 = arith.constant 0 : i32
    %c0_i32_1 = arith.constant 0 : i32
    return %c0_i32, %c0_i32_0 : i32, i32
  }
  func.func @transform_1(%arg0: i32, %arg1: i32) -> (i32, i32) {
    %c0_i32 = arith.constant 0 : i32
    %c0_i32_0 = arith.constant 0 : i32
    %c0_i32_1 = arith.constant 0 : i32
    return %c0_i32, %c0_i32_0 : i32, i32
  }
  func.func @transform_2(%arg0: i32, %arg1: i32) -> (i32, i32) {
    %c0_i32 = arith.constant 0 : i32
    %c0_i32_0 = arith.constant 0 : i32
    %c0_i32_1 = arith.constant 0 : i32
    return %c0_i32, %c0_i32_0 : i32, i32
  }
  func.func @transform_3(%arg0: i32, %arg1: i32) -> (i32, i32) {
    %c1_i32 = arith.constant 1 : i32
    %0 = arith.muli %arg0, %c1_i32 : i32
    %1 = arith.addi %0, %arg1 : i32
    %c0_i32 = arith.constant 0 : i32
    %c0_i32_0 = arith.constant 0 : i32
    return %1, %c0_i32 : i32, i32
  }
  func.func @transform_4(%arg0: i32, %arg1: i32) -> (i32, i32) {
    %c0_i32 = arith.constant 0 : i32
    %c0_i32_0 = arith.constant 0 : i32
    %c0_i32_1 = arith.constant 0 : i32
    return %c0_i32, %c0_i32_0 : i32, i32
  }
  func.func @transform_5(%arg0: i32, %arg1: i32) -> (i32, i32) {
    %c0_i32 = arith.constant 0 : i32
    %c0_i32_0 = arith.constant 0 : i32
    %c0_i32_1 = arith.constant 0 : i32
    return %c0_i32, %c0_i32_0 : i32, i32
  }
  func.func @transform_6(%arg0: i32, %arg1: i32) -> (i32, i32) {
    %c1_i32 = arith.constant 1 : i32
    %0 = arith.muli %arg0, %c1_i32 : i32
    %1 = arith.addi %0, %arg1 : i32
    %c0_i32 = arith.constant 0 : i32
    %c0_i32_0 = arith.constant 0 : i32
    return %1, %c0_i32 : i32, i32
  }
}

</mosaic_0001>

<llo_original>
// kernel: tpu_custom_call.1
$region0: #{tpu_custom_call.1}
  #allocation0 [shape = 'u32[]', space=smem, size = 0x4, offset = 0x4, fixed_abs, tag = 'smem constant byte address 0x4 - core index']
  #allocation1 [shape = 'u32[72,128]{1,0:T(1,128)}', space=vmem, size = 0x9000, scoped, tag = 'internal scratch']
  #allocation2 [shape = 'bf16[128,128]{1,0:T(8,128)(2,1)}', space=vmem, size = 0x8000, scoped, tag = 'scratch operand']
  %s0 = inlined_call_operand.hbm [shape: bf16[128,128], index: 0, kind: input, shape index: {}]
  %s1 = inlined_call_operand.hbm [shape: bf16[128,128], index: 1, kind: input, shape index: {}]
  %s2 = inlined_call_operand.vmem [shape: f32[1,128], index: 2, kind: input, shape index: {}]
  %s3 = inlined_call_operand.hbm [shape: bf16[8,128], index: 3, kind: input, shape index: {}]
  %s4 = inlined_call_operand.hbm [shape: bf16[128,128], index: 4, kind: input, shape index: {}]
  %s5 = inlined_call_operand.vmem [shape: f32[1,128], index: 5, kind: input, shape index: {}]
  %s6 = inlined_call_operand.hbm [shape: bf16[8,128], index: 6, kind: output, shape index: {}]
  %s7 = sld [smem:[#allocation0]]
  $region54: #{tpu_custom_call.1} parent=0
    _
  %s9 = ssub.s32 1, %s7
  %s10 = scalar_select 0, %s9, %s7
  $region1: #{tpu_custom_call.1} parent=0
    #allocation3 [shape = 'u8[32768]{0}', space=vmem, size = 0x8000, scoped, tag = 'input window, operand 0, single buffered']
    #allocation4 [shape = 's32[1]{0}', space=sflag, size = 0x4, scoped, tag = 'scoped memory for tpu_custom_call.1']
    #allocation5 [shape = 's32[1]{0}', space=sflag, size = 0x4, scoped, tag = 'scoped memory for tpu_custom_call.1']
    #allocation6 [shape = 'u8[32768]{0}', space=vmem, size = 0x8000, scoped, tag = 'input window, operand 1, single buffered']
    #allocation7 [shape = 's32[1]{0}', space=sflag, size = 0x4, scoped, tag = 'scoped memory for tpu_custom_call.1']
    #allocation8 [shape = 'u8[2048]{0}', space=vmem, size = 0x800, scoped, tag = 'input window, operand 3, single buffered']
    #allocation9 [shape = 'u8[32768]{0}', space=vmem, size = 0x8000, scoped, tag = 'input window, operand 4, single buffered']
    #allocation10 [shape = 's32[1]{0}', space=sflag, size = 0x4, scoped, tag = 'scoped memory for tpu_custom_call.1']
    #allocation11 [shape = 'u8[2048]{0}', space=vmem, size = 0x800, scoped, tag = 'output window, operand 0, single buffered']
    %11 = vsyncpa [#allocation4], 0
    %12 = vsyncpa [#allocation7], 0
    %13 = vsyncpa [#allocation10], 0
    %14 = vsyncpa [#allocation5], 0
    // Predicated region
    $region2: #{tpu_custom_call.1} parent=1 // pred_check
      _
    $region3: #{tpu_custom_call.1} parent=1 // pred_check_branch
      %16 = sbr.rel (0) target = $region5
    $region4: #{tpu_custom_call.1} parent=1 // pred_region
      %18 = vsyncadd [#allocation4], 0
      %s19 = sshll.u32 %s0, 4
      %s20 = int_to_ptr.hbm [resolvable:$true] %s19
      %s21 = sshll.u32 [#allocation3], 4
      %s22 = int_to_ptr.vmem [resolvable:$true] %s21
      %27 = dma.hbm_to_vmem [thread:$0]  %s20, 1024, %s22, [#allocation4], 64, 64, 4
    $region5: #{tpu_custom_call.1} parent=1 // pred_fallthru
      _
    // Predicated region
    $region6: #{tpu_custom_call.1} parent=1 // pred_check
      _
    $region7: #{tpu_custom_call.1} parent=1 // pred_check_branch
      %29 = sbr.rel (0) target = $region9
    $region8: #{tpu_custom_call.1} parent=1 // pred_region
      %31 = vsyncadd [#allocation7], 0
      %s32 = sshll.u32 %s1, 4
      %s33 = int_to_ptr.hbm [resolvable:$true] %s32
      %s34 = sshll.u32 [#allocation6], 4
      %s35 = int_to_ptr.vmem [resolvable:$true] %s34
      %40 = dma.hbm_to_vmem [thread:$0]  %s33, 1024, %s35, [#allocation7], 64, 64, 4
    $region9: #{tpu_custom_call.1} parent=1 // pred_fallthru
      _
    // Predicated region
    $region10: #{tpu_custom_call.1} parent=1 // pred_check
      _
    $region11: #{tpu_custom_call.1} parent=1 // pred_check_branch
      %42 = sbr.rel (0) target = $region13
    $region12: #{tpu_custom_call.1} parent=1 // pred_region
      _
    $region13: #{tpu_custom_call.1} parent=1 // pred_fallthru
      _
    // Predicated region
    $region14: #{tpu_custom_call.1} parent=1 // pred_check
      _
    $region15: #{tpu_custom_call.1} parent=1 // pred_check_branch
      %44 = sbr.rel (0) target = $region17
    $region16: #{tpu_custom_call.1} parent=1 // pred_region
      %s45 = sadd.s32 0, 0
      %47 = vsyncadd [#allocation7], 0
      %s48 = smul.addr %s45, 4
      %s49 = scalar_lea.hbm %s3, %s48
      %s51 = sshll.u32 %s49, 4
      %s52 = int_to_ptr.hbm [resolvable:$true] %s51
      %s53 = sshll.u32 [#allocation8], 4
      %s54 = int_to_ptr.vmem [resolvable:$true] %s53
      %56 = dma.hbm_to_vmem [thread:$0]  %s52, 64, %s54, [#allocation7]
    $region17: #{tpu_custom_call.1} parent=1 // pred_fallthru
      _
    // Predicated region
    $region18: #{tpu_custom_call.1} parent=1 // pred_check
      _
    $region19: #{tpu_custom_call.1} parent=1 // pred_check_branch
      %58 = sbr.rel (0) target = $region21
    $region20: #{tpu_custom_call.1} parent=1 // pred_region
      %60 = vsyncadd [#allocation10], 0
      %s61 = sshll.u32 %s4, 4
      %s62 = int_to_ptr.hbm [resolvable:$true] %s61
      %s63 = sshll.u32 [#allocation9], 4
      %s64 = int_to_ptr.vmem [resolvable:$true] %s63
      %69 = dma.hbm_to_vmem [thread:$0]  %s62, 1024, %s64, [#allocation10], 64, 64, 4
    $region21: #{tpu_custom_call.1} parent=1 // pred_fallthru
      _
    // Predicated region
    $region22: #{tpu_custom_call.1} parent=1 // pred_check
      _
    $region23: #{tpu_custom_call.1} parent=1 // pred_check_branch
      %71 = sbr.rel (0) target = $region25
    $region24: #{tpu_custom_call.1} parent=1 // pred_region
      _
    $region25: #{tpu_custom_call.1} parent=1 // pred_fallthru
      _
    // Predicated region
    $region26: #{tpu_custom_call.1} parent=1 // pred_check
      _
    $region27: #{tpu_custom_call.1} parent=1 // pred_check_branch
      %73 = sbr.rel (0) target = $region29
    $region28: #{tpu_custom_call.1} parent=1 // pred_region
      %75 = dma.done [#allocation4], 1024
    $region29: #{tpu_custom_call.1} parent=1 // pred_fallthru
      _
    // Predicated region
    $region30: #{tpu_custom_call.1} parent=1 // pred_check
      _
    $region31: #{tpu_custom_call.1} parent=1 // pred_check_branch
      %77 = sbr.rel (0) target = $region33
    $region32: #{tpu_custom_call.1} parent=1 // pred_region
      %79 = dma.done [#allocation7], 1024
    $region33: #{tpu_custom_call.1} parent=1 // pred_fallthru
      _
    // Predicated region
    $region34: #{tpu_custom_call.1} parent=1 // pred_check
      _
    $region35: #{tpu_custom_call.1} parent=1 // pred_check_branch
      %81 = sbr.rel (0) target = $region37
    $region36: #{tpu_custom_call.1} parent=1 // pred_region
      %83 = dma.done [#allocation7], 64
    $region37: #{tpu_custom_call.1} parent=1 // pred_fallthru
      _
    // Predicated region
    $region38: #{tpu_custom_call.1} parent=1 // pred_check
      _
    $region39: #{tpu_custom_call.1} parent=1 // pred_check_branch
      %85 = sbr.rel (0) target = $region41
    $region40: #{tpu_custom_call.1} parent=1 // pred_region
      %87 = dma.done [#allocation10], 1024
    $region41: #{tpu_custom_call.1} parent=1 // pred_fallthru
      _
    %s88 = sadd.s32 0, 0
    %s89 = sadd.s32 0, 0
    %p90 = scmp.eq.s32.totalorder 0, 0
    // Predicated region
    $region42: #{tpu_custom_call.1} parent=1 // pred_check
      %p91 = pneg %p90
    $region43: #{tpu_custom_call.1} parent=1 // pred_check_branch
      %93 = sbr.rel (%p91) target = $region45
    $region44: #{tpu_custom_call.1} parent=1 // pred_region
      %v94 = vld [vmem:[#allocation3] sm:$0xf]
      %v95 = vld [vmem:[#allocation3 + $0x4] sm:$0xf]
      %v96 = vld [vmem:[#allocation3 + $0x8] sm:$0xf]
      %v97 = vld [vmem:[#allocation3 + $0xc] sm:$0xf]
      %v98 = vld [vmem:[#allocation3 + $0x10] sm:$0xf]
      %v99 = vld [vmem:[#allocation3 + $0x14] sm:$0xf]
      %v100 = vld [vmem:[#allocation3 + $0x18] sm:$0xf]
      %v101 = vld [vmem:[#allocation3 + $0x1c] sm:$0xf]
      %v102 = vld [vmem:[#allocation3 + $0x20] sm:$0xf]
      %v103 = vld [vmem:[#allocation3 + $0x24] sm:$0xf]
      %v104 = vld [vmem:[#allocation3 + $0x28] sm:$0xf]
      %v105 = vld [vmem:[#allocation3 + $0x2c] sm:$0xf]
      %v106 = vld [vmem:[#allocation3 + $0x30] sm:$0xf]
      %v107 = vld [vmem:[#allocation3 + $0x34] sm:$0xf]
      %v108 = vld [vmem:[#allocation3 + $0x38] sm:$0xf]
      %v109 = vld [vmem:[#allocation3 + $0x3c] sm:$0xf]
      %v110 = vld [vmem:[#allocation6] sm:$0xf]
      %v111 = vld [vmem:[#allocation6 + $0x4] sm:$0xf]
      %v112 = vld [vmem:[#allocation6 + $0x8] sm:$0xf]
      %v113 = vld [vmem:[#allocation6 + $0xc] sm:$0xf]
      %v114 = vld [vmem:[#allocation6 + $0x10] sm:$0xf]
      %v115 = vld [vmem:[#allocation6 + $0x14] sm:$0xf]
      %v116 = vld [vmem:[#allocation6 + $0x18] sm:$0xf]
      %v117 = vld [vmem:[#allocation6 + $0x1c] sm:$0xf]
      %v118 = vld [vmem:[#allocation6 + $0x20] sm:$0xf]
      %v119 = vld [vmem:[#allocation6 + $0x24] sm:$0xf]
      %v120 = vld [vmem:[#allocation6 + $0x28] sm:$0xf]
      %v121 = vld [vmem:[#allocation6 + $0x2c] sm:$0xf]
      %v122 = vld [vmem:[#allocation6 + $0x30] sm:$0xf]
      %v123 = vld [vmem:[#allocation6 + $0x34] sm:$0xf]
      %v124 = vld [vmem:[#allocation6 + $0x38] sm:$0xf]
      %v125 = vld [vmem:[#allocation6 + $0x3c] sm:$0xf]
      %v126 = vld [vmem:[%s2] sm:$0x1]
      %v128 = vperm.slane %v126, 0
      %v146 = vunpack.c.l.b16 %v94
      %v147 = vunpack.c.l.b16 %v95
      %v148 = vunpack.c.l.b16 %v96
      %v149 = vunpack.c.l.b16 %v97
      %v150 = vunpack.c.l.b16 %v98
      %v151 = vunpack.c.l.b16 %v99
      %v152 = vunpack.c.l.b16 %v100
      %v153 = vunpack.c.l.b16 %v101
      %v154 = vunpack.c.l.b16 %v102
      %v155 = vunpack.c.l.b16 %v103
      %v156 = vunpack.c.l.b16 %v104
      %v157 = vunpack.c.l.b16 %v105
      %v158 = vunpack.c.l.b16 %v106
      %v159 = vunpack.c.l.b16 %v107
      %v160 = vunpack.c.l.b16 %v108
      %v161 = vunpack.c.l.b16 %v109
      %v162 = vpack.c.b16 %v147, %v146
      %v163 = vpack.c.b16 %v149, %v148
      %v164 = vpack.c.b16 %v151, %v150
      %v165 = vpack.c.b16 %v153, %v152
      %v166 = vpack.c.b16 %v155, %v154
      %v167 = vpack.c.b16 %v157, %v156
      %v168 = vpack.c.b16 %v159, %v158
      %v169 = vpack.c.b16 %v161, %v160
      %v194 = vunpack.c.l.b16 %v110
      %v195 = vunpack.c.l.b16 %v111
      %v196 = vunpack.c.l.b16 %v112
      %v197 = vunpack.c.l.b16 %v113
      %v198 = vunpack.c.l.b16 %v114
      %v199 = vunpack.c.l.b16 %v115
      %v200 = vunpack.c.l.b16 %v116
      %v201 = vunpack.c.l.b16 %v117
      %v202 = vunpack.c.l.b16 %v118
      %v203 = vunpack.c.l.b16 %v119
      %v204 = vunpack.c.l.b16 %v120
      %v205 = vunpack.c.l.b16 %v121
      %v206 = vunpack.c.l.b16 %v122
      %v207 = vunpack.c.l.b16 %v123
      %v208 = vunpack.c.l.b16 %v124
      %v209 = vunpack.c.l.b16 %v125
      %v210 = vpack.c.b16 %v195, %v194
      %v211 = vpack.c.b16 %v197, %v196
      %v212 = vpack.c.b16 %v199, %v198
      %v213 = vpack.c.b16 %v201, %v200
      %v214 = vpack.c.b16 %v203, %v202
      %v215 = vpack.c.b16 %v205, %v204
      %v216 = vpack.c.b16 %v207, %v206
      %v217 = vpack.c.b16 %v209, %v208
      %226 = vmatpush.bf16.msra.mxu0 %v217
      %227 = vmatpush.bf16.msra.mxu0 %v216
      %228 = vmatpush.bf16.msra.mxu0 %v215
      %229 = vmatpush.bf16.msra.mxu0 %v214
      %230 = vmatpush.bf16.msra.mxu0 %v213
      %231 = vmatpush.bf16.msra.mxu0 %v212
      %232 = vmatpush.bf16.msra.mxu0 %v211
      %233 = vmatpush.bf16.msra.mxu0 %v210
      %234 = vmatmul.bf16.gmra.mxu0 %v162
      %v235 = vpop.f32.mrf.mxu0
      %v236 = vadd.f32 %v128, %v235
      %v237 = vpop.f32.mrf.mxu0
      %v238 = vadd.f32 %v128, %v237
      %239 = vmatmul.bf16.gmra.mxu0 %v163
      %v240 = vpop.f32.mrf.mxu0
      %v241 = vadd.f32 %v128, %v240
      %v242 = vpop.f32.mrf.mxu0
      %v243 = vadd.f32 %v128, %v242
      %244 = vmatmul.bf16.gmra.mxu0 %v164
      %v245 = vpop.f32.mrf.mxu0
      %v246 = vadd.f32 %v128, %v245
      %v247 = vpop.f32.mrf.mxu0
      %v248 = vadd.f32 %v128, %v247
      %249 = vmatmul.bf16.gmra.mxu0 %v165
      %v250 = vpop.f32.mrf.mxu0
      %v251 = vadd.f32 %v128, %v250
      %v252 = vpop.f32.mrf.mxu0
      %v253 = vadd.f32 %v128, %v252
      %254 = vmatmul.bf16.gmra.mxu0 %v166
      %v255 = vpop.f32.mrf.mxu0
      %v256 = vadd.f32 %v128, %v255
      %v257 = vpop.f32.mrf.mxu0
      %v258 = vadd.f32 %v128, %v257
      %259 = vmatmul.bf16.gmra.mxu0 %v167
      %v260 = vpop.f32.mrf.mxu0
      %v261 = vadd.f32 %v128, %v260
      %v262 = vpop.f32.mrf.mxu0
      %v263 = vadd.f32 %v128, %v262
      %264 = vmatmul.bf16.gmra.mxu0 %v168
      %v265 = vpop.f32.mrf.mxu0
      %v266 = vadd.f32 %v128, %v265
      %v267 = vpop.f32.mrf.mxu0
      %v268 = vadd.f32 %v128, %v267
      %269 = vmatmul.bf16.gmra.mxu0 %v169
      %v270 = vpop.f32.mrf.mxu0
      %v271 = vadd.f32 %v128, %v270
      %v272 = vpop.f32.mrf.mxu0
      %v273 = vadd.f32 %v128, %v272
      %274 = vdwg.mxu0
      %v275 = vmul.f32 %v236, %v236
      %v276 = vmul.f32 %v238, %v238
      %v277 = vmul.f32 %v241, %v241
      %v278 = vmul.f32 %v243, %v243
      %v279 = vmul.f32 %v246, %v246
      %v280 = vmul.f32 %v248, %v248
      %v281 = vmul.f32 %v251, %v251
      %v282 = vmul.f32 %v253, %v253
      %v283 = vmul.f32 %v256, %v256
      %v284 = vmul.f32 %v258, %v258
      %v285 = vmul.f32 %v261, %v261
      %v286 = vmul.f32 %v263, %v263
      %v287 = vmul.f32 %v266, %v266
      %v288 = vmul.f32 %v268, %v268
      %v289 = vmul.f32 %v271, %v271
      %v290 = vmul.f32 %v273, %v273
      %291 = vadd.xlane.f32.xlu0 %v275
      %v292 = vpop.xlane.xlu0 %291
      %293 = vadd.xlane.f32.xlu0 %v276
      %v294 = vpop.xlane.xlu0 %293
      %295 = vadd.xlane.f32.xlu0 %v277
      %v296 = vpop.xlane.xlu0 %295
      %297 = vadd.xlane.f32.xlu0 %v278
      %v298 = vpop.xlane.xlu0 %297
      %299 = vadd.xlane.f32.xlu0 %v279
      %v300 = vpop.xlane.xlu0 %299
      %301 = vadd.xlane.f32.xlu0 %v280
      %v302 = vpop.xlane.xlu0 %301
      %303 = vadd.xlane.f32.xlu0 %v281
      %v304 = vpop.xlane.xlu0 %303
      %305 = vadd.xlane.f32.xlu0 %v282
      %v306 = vpop.xlane.xlu0 %305
      %307 = vadd.xlane.f32.xlu0 %v283
      %v308 = vpop.xlane.xlu0 %307
      %309 = vadd.xlane.f32.xlu0 %v284
      %v310 = vpop.xlane.xlu0 %309
      %311 = vadd.xlane.f32.xlu0 %v285
      %v312 = vpop.xlane.xlu0 %311
      %313 = vadd.xlane.f32.xlu0 %v286
      %v314 = vpop.xlane.xlu0 %313
      %315 = vadd.xlane.f32.xlu0 %v287
      %v316 = vpop.xlane.xlu0 %315
      %317 = vadd.xlane.f32.xlu0 %v288
      %v318 = vpop.xlane.xlu0 %317
      %319 = vadd.xlane.f32.xlu0 %v289
      %v320 = vpop.xlane.xlu0 %319
      %321 = vadd.xlane.f32.xlu0 %v290
      %v322 = vpop.xlane.xlu0 %321
      %v323 = vmax.f32 %v292, 1e-16
      %v324 = vmax.f32 %v294, 1e-16
      %v325 = vmax.f32 %v296, 1e-16
      %v326 = vmax.f32 %v298, 1e-16
      %v327 = vmax.f32 %v300, 1e-16
      %v328 = vmax.f32 %v302, 1e-16
      %v329 = vmax.f32 %v304, 1e-16
      %v330 = vmax.f32 %v306, 1e-16
      %v331 = vmax.f32 %v308, 1e-16
      %v332 = vmax.f32 %v310, 1e-16
      %v333 = vmax.f32 %v312, 1e-16
      %v334 = vmax.f32 %v314, 1e-16
      %v335 = vmax.f32 %v316, 1e-16
      %v336 = vmax.f32 %v318, 1e-16
      %v337 = vmax.f32 %v320, 1e-16
      %v338 = vmax.f32 %v322, 1e-16
      %v339 = vrsqrt.pop %v323
      %v340 = vmul.f32 %v339, %v323
      %v341 = vmul.f32 %v340, %v339
      %v342 = vmul.f32 0.5, %v341
      %v343 = vsub.f32 1.5, %v342
      %v344 = vmul.f32 %v339, %v343
      %vm345 = vweird.f32 %v323
      %vm346 = vweird.f32 %v339
      %vm347 = vmor %vm345, %vm346
      %v348 = vsel %vm347, %v339, %v344
      %v349 = vrsqrt.pop %v324
      %v350 = vmul.f32 %v349, %v324
      %v351 = vmul.f32 %v350, %v349
      %v352 = vmul.f32 0.5, %v351
      %v353 = vsub.f32 1.5, %v352
      %v354 = vmul.f32 %v349, %v353
      %vm355 = vweird.f32 %v324
      %vm356 = vweird.f32 %v349
      %vm357 = vmor %vm355, %vm356
      %v358 = vsel %vm357, %v349, %v354
      %v359 = vrsqrt.pop %v325
      %v360 = vmul.f32 %v359, %v325
      %v361 = vmul.f32 %v360, %v359
      %v362 = vmul.f32 0.5, %v361
      %v363 = vsub.f32 1.5, %v362
      %v364 = vmul.f32 %v359, %v363
      %vm365 = vweird.f32 %v325
      %vm366 = vweird.f32 %v359
      %vm367 = vmor %vm365, %vm366
      %v368 = vsel %vm367, %v359, %v364
      %v369 = vrsqrt.pop %v326
      %v370 = vmul.f32 %v369, %v326
      %v371 = vmul.f32 %v370, %v369
      %v372 = vmul.f32 0.5, %v371
      %v373 = vsub.f32 1.5, %v372
      %v374 = vmul.f32 %v369, %v373
      %vm375 = vweird.f32 %v326
      %vm376 = vweird.f32 %v369
      %vm377 = vmor %vm375, %vm376
      %v378 = vsel %vm377, %v369, %v374
      %v379 = vrsqrt.pop %v327
      %v380 = vmul.f32 %v379, %v327
      %v381 = vmul.f32 %v380, %v379
      %v382 = vmul.f32 0.5, %v381
      %v383 = vsub.f32 1.5, %v382
      %v384 = vmul.f32 %v379, %v383
      %vm385 = vweird.f32 %v327
      %vm386 = vweird.f32 %v379
      %vm387 = vmor %vm385, %vm386
      %v388 = vsel %vm387, %v379, %v384
      %v389 = vrsqrt.pop %v328
      %v390 = vmul.f32 %v389, %v328
      %v391 = vmul.f32 %v390, %v389
      %v392 = vmul.f32 0.5, %v391
      %v393 = vsub.f32 1.5, %v392
      %v394 = vmul.f32 %v389, %v393
      %vm395 = vweird.f32 %v328
      %vm396 = vweird.f32 %v389
      %vm397 = vmor %vm395, %vm396
      %v398 = vsel %vm397, %v389, %v394
      %v399 = vrsqrt.pop %v329
      %v400 = vmul.f32 %v399, %v329
      %v401 = vmul.f32 %v400, %v399
      %v402 = vmul.f32 0.5, %v401
      %v403 = vsub.f32 1.5, %v402
      %v404 = vmul.f32 %v399, %v403
      %vm405 = vweird.f32 %v329
      %vm406 = vweird.f32 %v399
      %vm407 = vmor %vm405, %vm406
      %v408 = vsel %vm407, %v399, %v404
      %v409 = vrsqrt.pop %v330
      %v410 = vmul.f32 %v409, %v330
      %v411 = vmul.f32 %v410, %v409
      %v412 = vmul.f32 0.5, %v411
      %v413 = vsub.f32 1.5, %v412
      %v414 = vmul.f32 %v409, %v413
      %vm415 = vweird.f32 %v330
      %vm416 = vweird.f32 %v409
      %vm417 = vmor %vm415, %vm416
      %v418 = vsel %vm417, %v409, %v414
      %v419 = vrsqrt.pop %v331
      %v420 = vmul.f32 %v419, %v331
      %v421 = vmul.f32 %v420, %v419
      %v422 = vmul.f32 0.5, %v421
      %v423 = vsub.f32 1.5, %v422
      %v424 = vmul.f32 %v419, %v423
      %vm425 = vweird.f32 %v331
      %vm426 = vweird.f32 %v419
      %vm427 = vmor %vm425, %vm426
      %v428 = vsel %vm427, %v419, %v424
      %v429 = vrsqrt.pop %v332
      %v430 = vmul.f32 %v429, %v332
      %v431 = vmul.f32 %v430, %v429
      %v432 = vmul.f32 0.5, %v431
      %v433 = vsub.f32 1.5, %v432
      %v434 = vmul.f32 %v429, %v433
      %vm435 = vweird.f32 %v332
      %vm436 = vweird.f32 %v429
      %vm437 = vmor %vm435, %vm436
      %v438 = vsel %vm437, %v429, %v434
      %v439 = vrsqrt.pop %v333
      %v440 = vmul.f32 %v439, %v333
      %v441 = vmul.f32 %v440, %v439
      %v442 = vmul.f32 0.5, %v441
      %v443 = vsub.f32 1.5, %v442
      %v444 = vmul.f32 %v439, %v443
      %vm445 = vweird.f32 %v333
      %vm446 = vweird.f32 %v439
      %vm447 = vmor %vm445, %vm446
      %v448 = vsel %vm447, %v439, %v444
      %v449 = vrsqrt.pop %v334
      %v450 = vmul.f32 %v449, %v334
      %v451 = vmul.f32 %v450, %v449
      %v452 = vmul.f32 0.5, %v451
      %v453 = vsub.f32 1.5, %v452
      %v454 = vmul.f32 %v449, %v453
      %vm455 = vweird.f32 %v334
      %vm456 = vweird.f32 %v449
      %vm457 = vmor %vm455, %vm456
      %v458 = vsel %vm457, %v449, %v454
      %v459 = vrsqrt.pop %v335
      %v460 = vmul.f32 %v459, %v335
      %v461 = vmul.f32 %v460, %v459
      %v462 = vmul.f32 0.5, %v461
      %v463 = vsub.f32 1.5, %v462
      %v464 = vmul.f32 %v459, %v463
      %vm465 = vweird.f32 %v335
      %vm466 = vweird.f32 %v459
      %vm467 = vmor %vm465, %vm466
      %v468 = vsel %vm467, %v459, %v464
      %v469 = vrsqrt.pop %v336
      %v470 = vmul.f32 %v469, %v336
      %v471 = vmul.f32 %v470, %v469
      %v472 = vmul.f32 0.5, %v471
      %v473 = vsub.f32 1.5, %v472
      %v474 = vmul.f32 %v469, %v473
      %vm475 = vweird.f32 %v336
      %vm476 = vweird.f32 %v469
      %vm477 = vmor %vm475, %vm476
      %v478 = vsel %vm477, %v469, %v474
      %v479 = vrsqrt.pop %v337
      %v480 = vmul.f32 %v479, %v337
      %v481 = vmul.f32 %v480, %v479
      %v482 = vmul.f32 0.5, %v481
      %v483 = vsub.f32 1.5, %v482
      %v484 = vmul.f32 %v479, %v483
      %vm485 = vweird.f32 %v337
      %vm486 = vweird.f32 %v479
      %vm487 = vmor %vm485, %vm486
      %v488 = vsel %vm487, %v479, %v484
      %v489 = vrsqrt.pop %v338
      %v490 = vmul.f32 %v489, %v338
      %v491 = vmul.f32 %v490, %v489
      %v492 = vmul.f32 0.5, %v491
      %v493 = vsub.f32 1.5, %v492
      %v494 = vmul.f32 %v489, %v493
      %vm495 = vweird.f32 %v338
      %vm496 = vweird.f32 %v489
      %vm497 = vmor %vm495, %vm496
      %v498 = vsel %vm497, %v489, %v494
      %v499 = vmul.f32 %v236, %v348
      %v500 = vmul.f32 %v238, %v358
      %v501 = vmul.f32 %v241, %v368
      %v502 = vmul.f32 %v243, %v378
      %v503 = vmul.f32 %v246, %v388
      %v504 = vmul.f32 %v248, %v398
      %v505 = vmul.f32 %v251, %v408
      %v506 = vmul.f32 %v253, %v418
      %v507 = vmul.f32 %v256, %v428
      %v508 = vmul.f32 %v258, %v438
      %v509 = vmul.f32 %v261, %v448
      %v510 = vmul.f32 %v263, %v458
      %v511 = vmul.f32 %v266, %v468
      %v512 = vmul.f32 %v268, %v478
      %v513 = vmul.f32 %v271, %v488
      %v514 = vmul.f32 %v273, %v498
      %v515 = vpack.c.bf16 %v499, %v499
      %v516 = vpack.c.bf16 %v500, %v500
      %v517 = vpack.c.bf16 %v501, %v501
      %v518 = vpack.c.bf16 %v502, %v502
      %v519 = vpack.c.bf16 %v503, %v503
      %v520 = vpack.c.bf16 %v504, %v504
      %v521 = vpack.c.bf16 %v505, %v505
      %v522 = vpack.c.bf16 %v506, %v506
      %v523 = vpack.c.bf16 %v507, %v507
      %v524 = vpack.c.bf16 %v508, %v508
      %v525 = vpack.c.bf16 %v509, %v509
      %v526 = vpack.c.bf16 %v510, %v510
      %v527 = vpack.c.bf16 %v511, %v511
      %v528 = vpack.c.bf16 %v512, %v512
      %v529 = vpack.c.bf16 %v513, %v513
      %v530 = vpack.c.bf16 %v514, %v514
      %531 = vst [vmem:[#allocation2] sm:$0xf] %v515
      %532 = vst [vmem:[#allocation2 + $0x4] sm:$0xf] %v516
      %533 = vst [vmem:[#allocation2 + $0x8] sm:$0xf] %v517
      %534 = vst [vmem:[#allocation2 + $0xc] sm:$0xf] %v518
      %535 = vst [vmem:[#allocation2 + $0x10] sm:$0xf] %v519
      %536 = vst [vmem:[#allocation2 + $0x14] sm:$0xf] %v520
      %537 = vst [vmem:[#allocation2 + $0x18] sm:$0xf] %v521
      %538 = vst [vmem:[#allocation2 + $0x1c] sm:$0xf] %v522
      %539 = vst [vmem:[#allocation2 + $0x20] sm:$0xf] %v523
      %540 = vst [vmem:[#allocation2 + $0x24] sm:$0xf] %v524
      %541 = vst [vmem:[#allocation2 + $0x28] sm:$0xf] %v525
      %542 = vst [vmem:[#allocation2 + $0x2c] sm:$0xf] %v526
      %543 = vst [vmem:[#allocation2 + $0x30] sm:$0xf] %v527
      %544 = vst [vmem:[#allocation2 + $0x34] sm:$0xf] %v528
      %545 = vst [vmem:[#allocation2 + $0x38] sm:$0xf] %v529
      %546 = vst [vmem:[#allocation2 + $0x3c] sm:$0xf] %v530
    $region45: #{tpu_custom_call.1} parent=1 // pred_fallthru
      _
    %v547 = vld [vmem:[#allocation8] sm:$0xf]
    %v548 = vld [vmem:[#allocation9] sm:$0xf]
    %v549 = vld [vmem:[#allocation9 + $0x4] sm:$0xf]
    %v550 = vld [vmem:[#allocation9 + $0x8] sm:$0xf]
    %v551 = vld [vmem:[#allocation9 + $0xc] sm:$0xf]
    %v552 = vld [vmem:[#allocation9 + $0x10] sm:$0xf]
    %v553 = vld [vmem:[#allocation9 + $0x14] sm:$0xf]
    %v554 = vld [vmem:[#allocation9 + $0x18] sm:$0xf]
    %v555 = vld [vmem:[#allocation9 + $0x1c] sm:$0xf]
    %v556 = vld [vmem:[#allocation9 + $0x20] sm:$0xf]
    %v557 = vld [vmem:[#allocation9 + $0x24] sm:$0xf]
    %v558 = vld [vmem:[#allocation9 + $0x28] sm:$0xf]
    %v559 = vld [vmem:[#allocation9 + $0x2c] sm:$0xf]
    %v560 = vld [vmem:[#allocation9 + $0x30] sm:$0xf]
    %v561 = vld [vmem:[#allocation9 + $0x34] sm:$0xf]
    %v562 = vld [vmem:[#allocation9 + $0x38] sm:$0xf]
    %v563 = vld [vmem:[#allocation9 + $0x3c] sm:$0xf]
    %v564 = vld [vmem:[%s5] sm:$0x1]
    %v566 = vperm.slane %v564, 0
    %v584 = vunpack.c.l.b16 %v548
    %v585 = vunpack.c.l.b16 %v549
    %v586 = vunpack.c.l.b16 %v550
    %v587 = vunpack.c.l.b16 %v551
    %v588 = vunpack.c.l.b16 %v552
    %v589 = vunpack.c.l.b16 %v553
    %v590 = vunpack.c.l.b16 %v554
    %v591 = vunpack.c.l.b16 %v555
    %v592 = vunpack.c.l.b16 %v556
    %v593 = vunpack.c.l.b16 %v557
    %v594 = vunpack.c.l.b16 %v558
    %v595 = vunpack.c.l.b16 %v559
    %v596 = vunpack.c.l.b16 %v560
    %v597 = vunpack.c.l.b16 %v561
    %v598 = vunpack.c.l.b16 %v562
    %v599 = vunpack.c.l.b16 %v563
    %v600 = vpack.c.b16 %v585, %v584
    %v601 = vpack.c.b16 %v587, %v586
    %v602 = vpack.c.b16 %v589, %v588
    %v603 = vpack.c.b16 %v591, %v590
    %v604 = vpack.c.b16 %v593, %v592
    %v605 = vpack.c.b16 %v595, %v594
    %v606 = vpack.c.b16 %v597, %v596
    %v607 = vpack.c.b16 %v599, %v598
    %616 = vmatpush.bf16.msra.mxu0 %v607
    %617 = vmatpush.bf16.msra.mxu0 %v606
    %618 = vmatpush.bf16.msra.mxu0 %v605
    %619 = vmatpush.bf16.msra.mxu0 %v604
    %620 = vmatpush.bf16.msra.mxu0 %v603
    %621 = vmatpush.bf16.msra.mxu0 %v602
    %622 = vmatpush.bf16.msra.mxu0 %v601
    %623 = vmatpush.bf16.msra.mxu0 %v600
    %624 = vmatmul.bf16.gmra.mxu0 %v547
    %v625 = vpop.f32.mrf.mxu0
    %v626 = vadd.f32 %v566, %v625
    %v627 = vpop.f32.mrf.mxu0
    %628 = vdwg.mxu0
    %v629 = vmul.f32 %v626, %v626
    %630 = vadd.xlane.f32.xlu0 %v629
    %v631 = vpop.xlane.xlu0 %630
    %v632 = vmax.f32 %v631, 1e-16
    %v633 = vrsqrt.pop %v632
    %v634 = vmul.f32 %v633, %v632
    %v635 = vmul.f32 %v634, %v633
    %v636 = vmul.f32 0.5, %v635
    %v637 = vsub.f32 1.5, %v636
    %v638 = vmul.f32 %v633, %v637
    %vm639 = vweird.f32 %v632
    %vm640 = vweird.f32 %v633
    %vm641 = vmor %vm639, %vm640
    %v642 = vsel %vm641, %v633, %v638
    %v643 = vmul.f32 %v626, %v642
    %v644 = vpack.c.bf16 %v643, %v643
    %v645 = vld [vmem:[#allocation2] sm:$0xf]
    %v646 = vld [vmem:[#allocation2 + $0x4] sm:$0xf]
    %v647 = vld [vmem:[#allocation2 + $0x8] sm:$0xf]
    %v648 = vld [vmem:[#allocation2 + $0xc] sm:$0xf]
    %v649 = vld [vmem:[#allocation2 + $0x10] sm:$0xf]
    %v650 = vld [vmem:[#allocation2 + $0x14] sm:$0xf]
    %v651 = vld [vmem:[#allocation2 + $0x18] sm:$0xf]
    %v652 = vld [vmem:[#allocation2 + $0x1c] sm:$0xf]
    %v653 = vld [vmem:[#allocation2 + $0x20] sm:$0xf]
    %v654 = vld [vmem:[#allocation2 + $0x24] sm:$0xf]
    %v655 = vld [vmem:[#allocation2 + $0x28] sm:$0xf]
    %v656 = vld [vmem:[#allocation2 + $0x2c] sm:$0xf]
    %v657 = vld [vmem:[#allocation2 + $0x30] sm:$0xf]
    %v658 = vld [vmem:[#allocation2 + $0x34] sm:$0xf]
    %v659 = vld [vmem:[#allocation2 + $0x38] sm:$0xf]
    %v660 = vld [vmem:[#allocation2 + $0x3c] sm:$0xf]
    %v677 = vunpack.c.l.b16 %v645
    %v678 = vunpack.c.l.b16 %v646
    %v679 = vunpack.c.l.b16 %v647
    %v680 = vunpack.c.l.b16 %v648
    %v681 = vunpack.c.l.b16 %v649
    %v682 = vunpack.c.l.b16 %v650
    %v683 = vunpack.c.l.b16 %v651
    %v684 = vunpack.c.l.b16 %v652
    %v685 = vunpack.c.l.b16 %v653
    %v686 = vunpack.c.l.b16 %v654
    %v687 = vunpack.c.l.b16 %v655
    %v688 = vunpack.c.l.b16 %v656
    %v689 = vunpack.c.l.b16 %v657
    %v690 = vunpack.c.l.b16 %v658
    %v691 = vunpack.c.l.b16 %v659
    %v692 = vunpack.c.l.b16 %v660
    %v693 = vpack.c.b16 %v678, %v677
    %v694 = vpack.c.b16 %v680, %v679
    %v695 = vpack.c.b16 %v682, %v681
    %v696 = vpack.c.b16 %v684, %v683
    %v697 = vpack.c.b16 %v686, %v685
    %v698 = vpack.c.b16 %v688, %v687
    %v699 = vpack.c.b16 %v690, %v689
    %v700 = vpack.c.b16 %v692, %v691
    %709 = vmatpush.bf16.xpose.msra.mxu0 %v700
    %710 = vmatpush.bf16.xpose.msra.mxu0 %v699
    %711 = vmatpush.bf16.xpose.msra.mxu0 %v698
    %712 = vmatpush.bf16.xpose.msra.mxu0 %v697
    %713 = vmatpush.bf16.xpose.msra.mxu0 %v696
    %714 = vmatpush.bf16.xpose.msra.mxu0 %v695
    %715 = vmatpush.bf16.xpose.msra.mxu0 %v694
    %716 = vmatpush.bf16.xpose.msra.mxu0 %v693
    %717 = vmatmul.bf16.gmra.mxu0 %v644
    %v718 = vpop.f32.mrf.mxu0
    %v719 = vadd.f32 0.0, %v718
    %v720 = vpop.f32.mrf.mxu0
    %721 = vdwg.mxu0
    %v722 = vmul.f32 %v719, 0.5
    %v723 = vlaneseq
    %v724 = vand.u32 %v723, 127
    %vm725 = vcmp.lt.s32.totalorder %v724, 4
    %v726 = vsel %vm725, %v722, -inf
    %727 = vmax.xlane.f32.xlu0 %v726
    %v728 = vpop.xlane.xlu0 %727
    %v729 = vsub.f32 %v726, %v728
    %v730 = vmul.f32 %v729, 1.442695
    %v731 = vpow.pop %v730
    %732 = vadd.xlane.f32.xlu0 %v731
    %v733 = vpop.xlane.xlu0 %732
    %v734 = vrcp.pop %v733
    %v735 = vmul.f32 %v731, %v734
    %v736 = vpack.c.bf16 %v735, %v735
    %737 = vst [vmem:[#allocation11] sm:$0xf] %v736
    // Predicated region
    $region46: #{tpu_custom_call.1} parent=1 // pred_check
      _
    $region47: #{tpu_custom_call.1} parent=1 // pred_check_branch
      %739 = sbr.rel (0) target = $region49
    $region48: #{tpu_custom_call.1} parent=1 // pred_region
      %s740 = sadd.s32 0, 0
      %742 = vsyncadd [#allocation5], 0
      %s743 = smul.addr %s740, 4
      %s744 = scalar_lea.hbm %s6, %s743
      %s746 = sshll.u32 [#allocation11], 4
      %s747 = int_to_ptr.vmem [resolvable:$true] %s746
      %s748 = sshll.u32 %s744, 4
      %s749 = int_to_ptr.hbm [resolvable:$true] %s748
      %751 = dma.vmem_to_hbm [thread:$0]  %s747, 64, %s749, [#allocation5]
    $region49: #{tpu_custom_call.1} parent=1 // pred_fallthru
      _
    // Predicated region
    $region50: #{tpu_custom_call.1} parent=1 // pred_check
      _
    $region51: #{tpu_custom_call.1} parent=1 // pred_check_branch
      %753 = sbr.rel (0) target = $region53
    $region52: #{tpu_custom_call.1} parent=1 // pred_region
      %755 = dma.done [#allocation5], 64
    $region53: #{tpu_custom_call.1} parent=1 // pred_fallthru
      _
    %756 = vsyncpa [#allocation4], 1
    %757 = vsyncpa [#allocation7], 1
    %758 = vsyncpa [#allocation10], 1
    %759 = vsyncpa [#allocation5], 1

// kernel: tpu_custom_call.1
$region0: #{tpu_custom_call.1}
  #allocation0 [shape = 'u32[]', space=smem, size = 0x4, offset = 0x4, fixed_abs, tag = 'smem constant byte address 0x4 - core index']
  #allocation1 [shape = 'u32[72,128]{1,0:T(1,128)}', space=vmem, size = 0x9000, scoped, tag = 'internal scratch']
  #allocation2 [shape = 'bf16[128,128]{1,0:T(8,128)(2,1)}', space=vmem, size = 0x8000, scoped, tag = 'scratch operand']
  %s0 = inlined_call_operand.hbm [shape: bf16[128,128], index: 0, kind: input, shape index: {}]
  %s1 = inlined_call_operand.hbm [shape: bf16[128,128], index: 1, kind: input, shape index: {}]
  %s2 = inlined_call_operand.vmem [shape: f32[1,128], index: 2, kind: input, shape index: {}]
  %s3 = inlined_call_operand.hbm [shape: bf16[8,128], index: 3, kind: input, shape index: {}]
  %s4 = inlined_call_operand.hbm [shape: bf16[128,128], index: 4, kind: input, shape index: {}]
  %s5 = inlined_call_operand.vmem [shape: f32[1,128], index: 5, kind: input, shape index: {}]
  %s6 = inlined_call_operand.hbm [shape: bf16[8,128], index: 6, kind: output, shape index: {}]
  %s7 = sld [smem:[#allocation0]]
  $region54: #{tpu_custom_call.1} parent=0
    _
  %s9 = ssub.s32 1, %s7
  %s10 = scalar_select 0, %s9, %s7
  $region1: #{tpu_custom_call.1} parent=0
    #allocation3 [shape = 'u8[32768]{0}', space=vmem, size = 0x8000, scoped, tag = 'input window, operand 0, single buffered']
    #allocation4 [shape = 's32[1]{0}', space=sflag, size = 0x4, scoped, tag = 'scoped memory for tpu_custom_call.1']
    #allocation5 [shape = 's32[1]{0}', space=sflag, size = 0x4, scoped, tag = 'scoped memory for tpu_custom_call.1']
    #allocation6 [shape = 'u8[32768]{0}', space=vmem, size = 0x8000, scoped, tag = 'input window, operand 1, single buffered']
    #allocation7 [shape = 's32[1]{0}', space=sflag, size = 0x4, scoped, tag = 'scoped memory for tpu_custom_call.1']
    #allocation8 [shape = 'u8[2048]{0}', space=vmem, size = 0x800, scoped, tag = 'input window, operand 3, single buffered']
    #allocation9 [shape = 'u8[32768]{0}', space=vmem, size = 0x8000, scoped, tag = 'input window, operand 4, single buffered']
    #allocation10 [shape = 's32[1]{0}', space=sflag, size = 0x4, scoped, tag = 'scoped memory for tpu_custom_call.1']
    #allocation11 [shape = 'u8[2048]{0}', space=vmem, size = 0x800, scoped, tag = 'output window, operand 0, single buffered']
    %11 = vsyncpa [#allocation4], 0
    %12 = vsyncpa [#allocation7], 0
    %13 = vsyncpa [#allocation10], 0
    %14 = vsyncpa [#allocation5], 0
    // Predicated region
    $region2: #{tpu_custom_call.1} parent=1 // pred_check
      _
    $region3: #{tpu_custom_call.1} parent=1 // pred_check_branch
      %16 = sbr.rel (0) target = $region5
    $region4: #{tpu_custom_call.1} parent=1 // pred_region
      %18 = vsyncadd [#allocation4], 0
      %s19 = sshll.u32 %s0, 4
      %s20 = int_to_ptr.hbm [resolvable:$true] %s19
      %s21 = sshll.u32 [#allocation3], 4
      %s22 = int_to_ptr.vmem [resolvable:$true] %s21
      %27 = dma.hbm_to_vmem [thread:$0]  %s20, 1024, %s22, [#allocation4], 64, 64, 4
    $region5: #{tpu_custom_call.1} parent=1 // pred_fallthru
      _
    // Predicated region
    $region6: #{tpu_custom_call.1} parent=1 // pred_check
      _
    $region7: #{tpu_custom_call.1} parent=1 // pred_check_branch
      %29 = sbr.rel (0) target = $region9
    $region8: #{tpu_custom_call.1} parent=1 // pred_region
      %31 = vsyncadd [#allocation7], 0
      %s32 = sshll.u32 %s1, 4
      %s33 = int_to_ptr.hbm [resolvable:$true] %s32
      %s34 = sshll.u32 [#allocation6], 4
      %s35 = int_to_ptr.vmem [resolvable:$true] %s34
      %40 = dma.hbm_to_vmem [thread:$0]  %s33, 1024, %s35, [#allocation7], 64, 64, 4
    $region9: #{tpu_custom_call.1} parent=1 // pred_fallthru
      _
    // Predicated region
    $region10: #{tpu_custom_call.1} parent=1 // pred_check
      _
    $region11: #{tpu_custom_call.1} parent=1 // pred_check_branch
      %42 = sbr.rel (0) target = $region13
    $region12: #{tpu_custom_call.1} parent=1 // pred_region
      _
    $region13: #{tpu_custom_call.1} parent=1 // pred_fallthru
      _
    // Predicated region
    $region14: #{tpu_custom_call.1} parent=1 // pred_check
      _
    $region15: #{tpu_custom_call.1} parent=1 // pred_check_branch
      %44 = sbr.rel (0) target = $region17
    $region16: #{tpu_custom_call.1} parent=1 // pred_region
      %s45 = sadd.s32 0, 0
      %47 = vsyncadd [#allocation7], 0
      %s48 = smul.addr %s45, 4
      %s49 = scalar_lea.hbm %s3, %s48
      %s51 = sshll.u32 %s49, 4
      %s52 = int_to_ptr.hbm [resolvable:$true] %s51
      %s53 = sshll.u32 [#allocation8], 4
      %s54 = int_to_ptr.vmem [resolvable:$true] %s53
      %56 = dma.hbm_to_vmem [thread:$0]  %s52, 64, %s54, [#allocation7]
    $region17: #{tpu_custom_call.1} parent=1 // pred_fallthru
      _
    // Predicated region
    $region18: #{tpu_custom_call.1} parent=1 // pred_check
      _
    $region19: #{tpu_custom_call.1} parent=1 // pred_check_branch
      %58 = sbr.rel (0) target = $region21
    $region20: #{tpu_custom_call.1} parent=1 // pred_region
      %60 = vsyncadd [#allocation10], 0
      %s61 = sshll.u32 %s4, 4
      %s62 = int_to_ptr.hbm [resolvable:$true] %s61
      %s63 = sshll.u32 [#allocation9], 4
      %s64 = int_to_ptr.vmem [resolvable:$true] %s63
      %69 = dma.hbm_to_vmem [thread:$0]  %s62, 1024, %s64, [#allocation10], 64, 64, 4
    $region21: #{tpu_custom_call.1} parent=1 // pred_fallthru
      _
    // Predicated region
    $region22: #{tpu_custom_call.1} parent=1 // pred_check
      _
    $region23: #{tpu_custom_call.1} parent=1 // pred_check_branch
      %71 = sbr.rel (0) target = $region25
    $region24: #{tpu_custom_call.1} parent=1 // pred_region
      _
    $region25: #{tpu_custom_call.1} parent=1 // pred_fallthru
      _
    // Predicated region
    $region26: #{tpu_custom_call.1} parent=1 // pred_check
      _
    $region27: #{tpu_custom_call.1} parent=1 // pred_check_branch
      %73 = sbr.rel (0) target = $region29
    $region28: #{tpu_custom_call.1} parent=1 // pred_region
      %75 = dma.done [#allocation4], 1024
    $region29: #{tpu_custom_call.1} parent=1 // pred_fallthru
      _
    // Predicated region
    $region30: #{tpu_custom_call.1} parent=1 // pred_check
      _
    $region31: #{tpu_custom_call.1} parent=1 // pred_check_branch
      %77 = sbr.rel (0) target = $region33
    $region32: #{tpu_custom_call.1} parent=1 // pred_region
      %79 = dma.done [#allocation7], 1024
    $region33: #{tpu_custom_call.1} parent=1 // pred_fallthru
      _
    // Predicated region
    $region34: #{tpu_custom_call.1} parent=1 // pred_check
      _
    $region35: #{tpu_custom_call.1} parent=1 // pred_check_branch
      %81 = sbr.rel (0) target = $region37
    $region36: #{tpu_custom_call.1} parent=1 // pred_region
      %83 = dma.done [#allocation7], 64
    $region37: #{tpu_custom_call.1} parent=1 // pred_fallthru
      _
    // Predicated region
    $region38: #{tpu_custom_call.1} parent=1 // pred_check
      _
    $region39: #{tpu_custom_call.1} parent=1 // pred_check_branch
      %85 = sbr.rel (0) target = $region41
    $region40: #{tpu_custom_call.1} parent=1 // pred_region
      %87 = dma.done [#allocation10], 1024
    $region41: #{tpu_custom_call.1} parent=1 // pred_fallthru
      _
    %s88 = sadd.s32 0, 0
    %s89 = sadd.s32 0, 0
    %p90 = scmp.eq.s32.totalorder 0, 0
    // Predicated region
    $region42: #{tpu_custom_call.1} parent=1 // pred_check
      %p91 = pneg %p90
    $region43: #{tpu_custom_call.1} parent=1 // pred_check_branch
      %93 = sbr.rel (%p91) target = $region45
    $region44: #{tpu_custom_call.1} parent=1 // pred_region
      %v94 = vld [vmem:[#allocation3] sm:$0xf]
      %v95 = vld [vmem:[#allocation3 + $0x4] sm:$0xf]
      %v96 = vld [vmem:[#allocation3 + $0x8] sm:$0xf]
      %v97 = vld [vmem:[#allocation3 + $0xc] sm:$0xf]
      %v98 = vld [vmem:[#allocation3 + $0x10] sm:$0xf]
      %v99 = vld [vmem:[#allocation3 + $0x14] sm:$0xf]
      %v100 = vld [vmem:[#allocation3 + $0x18] sm:$0xf]
      %v101 = vld [vmem:[#allocation3 + $0x1c] sm:$0xf]
      %v102 = vld [vmem:[#allocation3 + $0x20] sm:$0xf]
      %v103 = vld [vmem:[#allocation3 + $0x24] sm:$0xf]
      %v104 = vld [vmem:[#allocation3 + $0x28] sm:$0xf]
      %v105 = vld [vmem:[#allocation3 + $0x2c] sm:$0xf]
      %v106 = vld [vmem:[#allocation3 + $0x30] sm:$0xf]
      %v107 = vld [vmem:[#allocation3 + $0x34] sm:$0xf]
      %v108 = vld [vmem:[#allocation3 + $0x38] sm:$0xf]
      %v109 = vld [vmem:[#allocation3 + $0x3c] sm:$0xf]
      %v110 = vld [vmem:[#allocation6] sm:$0xf]
      %v111 = vld [vmem:[#allocation6 + $0x4] sm:$0xf]
      %v112 = vld [vmem:[#allocation6 + $0x8] sm:$0xf]
      %v113 = vld [vmem:[#allocation6 + $0xc] sm:$0xf]
      %v114 = vld [vmem:[#allocation6 + $0x10] sm:$0xf]
      %v115 = vld [vmem:[#allocation6 + $0x14] sm:$0xf]
      %v116 = vld [vmem:[#allocation6 + $0x18] sm:$0xf]
      %v117 = vld [vmem:[#allocation6 + $0x1c] sm:$0xf]
      %v118 = vld [vmem:[#allocation6 + $0x20] sm:$0xf]
      %v119 = vld [vmem:[#allocation6 + $0x24] sm:$0xf]
      %v120 = vld [vmem:[#allocation6 + $0x28] sm:$0xf]
      %v121 = vld [vmem:[#allocation6 + $0x2c] sm:$0xf]
      %v122 = vld [vmem:[#allocation6 + $0x30] sm:$0xf]
      %v123 = vld [vmem:[#allocation6 + $0x34] sm:$0xf]
      %v124 = vld [vmem:[#allocation6 + $0x38] sm:$0xf]
      %v125 = vld [vmem:[#allocation6 + $0x3c] sm:$0xf]
      %v126 = vld [vmem:[%s2] sm:$0x1]
      %v128 = vperm.slane %v126, 0
      %v146 = vunpack.c.l.b16 %v94
      %v147 = vunpack.c.l.b16 %v95
      %v148 = vunpack.c.l.b16 %v96
      %v149 = vunpack.c.l.b16 %v97
      %v150 = vunpack.c.l.b16 %v98
      %v151 = vunpack.c.l.b16 %v99
      %v152 = vunpack.c.l.b16 %v100
      %v153 = vunpack.c.l.b16 %v101
      %v154 = vunpack.c.l.b16 %v102
      %v155 = vunpack.c.l.b16 %v103
      %v156 = vunpack.c.l.b16 %v104
      %v157 = vunpack.c.l.b16 %v105
      %v158 = vunpack.c.l.b16 %v106
      %v159 = vunpack.c.l.b16 %v107
      %v160 = vunpack.c.l.b16 %v108
      %v161 = vunpack.c.l.b16 %v109
      %v162 = vpack.c.b16 %v147, %v146
      %v163 = vpack.c.b16 %v149, %v148
      %v164 = vpack.c.b16 %v151, %v150
      %v165 = vpack.c.b16 %v153, %v152
      %v166 = vpack.c.b16 %v155, %v154
      %v167 = vpack.c.b16 %v157, %v156
      %v168 = vpack.c.b16 %v159, %v158
      %v169 = vpack.c.b16 %v161, %v160
      %v194 = vunpack.c.l.b16 %v110
      %v195 = vunpack.c.l.b16 %v111
      %v196 = vunpack.c.l.b16 %v112
      %v197 = vunpack.c.l.b16 %v113
      %v198 = vunpack.c.l.b16 %v114
      %v199 = vunpack.c.l.b16 %v115
      %v200 = vunpack.c.l.b16 %v116
      %v201 = vunpack.c.l.b16 %v117
      %v202 = vunpack.c.l.b16 %v118
      %v203 = vunpack.c.l.b16 %v119
      %v204 = vunpack.c.l.b16 %v120
      %v205 = vunpack.c.l.b16 %v121
      %v206 = vunpack.c.l.b16 %v122
      %v207 = vunpack.c.l.b16 %v123
      %v208 = vunpack.c.l.b16 %v124
      %v209 = vunpack.c.l.b16 %v125
      %v210 = vpack.c.b16 %v195, %v194
      %v211 = vpack.c.b16 %v197, %v196
      %v212 = vpack.c.b16 %v199, %v198
      %v213 = vpack.c.b16 %v201, %v200
      %v214 = vpack.c.b16 %v203, %v202
      %v215 = vpack.c.b16 %v205, %v204
      %v216 = vpack.c.b16 %v207, %v206
      %v217 = vpack.c.b16 %v209, %v208
      %226 = vmatpush.bf16.msra.mxu0 %v217
      %227 = vmatpush.bf16.msra.mxu0 %v216
      %228 = vmatpush.bf16.msra.mxu0 %v215
      %229 = vmatpush.bf16.msra.mxu0 %v214
      %230 = vmatpush.bf16.msra.mxu0 %v213
      %231 = vmatpush.bf16.msra.mxu0 %v212
      %232 = vmatpush.bf16.msra.mxu0 %v211
      %233 = vmatpush.bf16.msra.mxu0 %v210
      %234 = vmatmul.bf16.gmra.mxu0 %v162
      %v235 = vpop.f32.mrf.mxu0
      %v236 = vadd.f32 %v128, %v235
      %v237 = vpop.f32.mrf.mxu0
      %v238 = vadd.f32 %v128, %v237
      %239 = vmatmul.bf16.gmra.mxu0 %v163
      %v240 = vpop.f32.mrf.mxu0
      %v241 = vadd.f32 %v128, %v240
      %v242 = vpop.f32.mrf.mxu0
      %v243 = vadd.f32 %v128, %v242
      %244 = vmatmul.bf16.gmra.mxu0 %v164
      %v245 = vpop.f32.mrf.mxu0
      %v246 = vadd.f32 %v128, %v245
      %v247 = vpop.f32.mrf.mxu0
      %v248 = vadd.f32 %v128, %v247
      %249 = vmatmul.bf16.gmra.mxu0 %v165
      %v250 = vpop.f32.mrf.mxu0
      %v251 = vadd.f32 %v128, %v250
      %v252 = vpop.f32.mrf.mxu0
      %v253 = vadd.f32 %v128, %v252
      %254 = vmatmul.bf16.gmra.mxu0 %v166
      %v255 = vpop.f32.mrf.mxu0
      %v256 = vadd.f32 %v128, %v255
      %v257 = vpop.f32.mrf.mxu0
      %v258 = vadd.f32 %v128, %v257
      %259 = vmatmul.bf16.gmra.mxu0 %v167
      %v260 = vpop.f32.mrf.mxu0
      %v261 = vadd.f32 %v128, %v260
      %v262 = vpop.f32.mrf.mxu0
      %v263 = vadd.f32 %v128, %v262
      %264 = vmatmul.bf16.gmra.mxu0 %v168
      %v265 = vpop.f32.mrf.mxu0
      %v266 = vadd.f32 %v128, %v265
      %v267 = vpop.f32.mrf.mxu0
      %v268 = vadd.f32 %v128, %v267
      %269 = vmatmul.bf16.gmra.mxu0 %v169
      %v270 = vpop.f32.mrf.mxu0
      %v271 = vadd.f32 %v128, %v270
      %v272 = vpop.f32.mrf.mxu0
      %v273 = vadd.f32 %v128, %v272
      %274 = vdwg.mxu0
      %v275 = vmul.f32 %v236, %v236
      %v276 = vmul.f32 %v238, %v238
      %v277 = vmul.f32 %v241, %v241
      %v278 = vmul.f32 %v243, %v243
      %v279 = vmul.f32 %v246, %v246
      %v280 = vmul.f32 %v248, %v248
      %v281 = vmul.f32 %v251, %v251
      %v282 = vmul.f32 %v253, %v253
      %v283 = vmul.f32 %v256, %v256
      %v284 = vmul.f32 %v258, %v258
      %v285 = vmul.f32 %v261, %v261
      %v286 = vmul.f32 %v263, %v263
      %v287 = vmul.f32 %v266, %v266
      %v288 = vmul.f32 %v268, %v268
      %v289 = vmul.f32 %v271, %v271
      %v290 = vmul.f32 %v273, %v273
      %291 = vadd.xlane.f32.xlu0 %v275
      %v292 = vpop.xlane.xlu0 %291
      %293 = vadd.xlane.f32.xlu0 %v276
      %v294 = vpop.xlane.xlu0 %293
      %295 = vadd.xlane.f32.xlu0 %v277
      %v296 = vpop.xlane.xlu0 %295
      %297 = vadd.xlane.f32.xlu0 %v278
      %v298 = vpop.xlane.xlu0 %297
      %299 = vadd.xlane.f32.xlu0 %v279
      %v300 = vpop.xlane.xlu0 %299
      %301 = vadd.xlane.f32.xlu0 %v280
      %v302 = vpop.xlane.xlu0 %301
      %303 = vadd.xlane.f32.xlu0 %v281
      %v304 = vpop.xlane.xlu0 %303
      %305 = vadd.xlane.f32.xlu0 %v282
      %v306 = vpop.xlane.xlu0 %305
      %307 = vadd.xlane.f32.xlu0 %v283
      %v308 = vpop.xlane.xlu0 %307
      %309 = vadd.xlane.f32.xlu0 %v284
      %v310 = vpop.xlane.xlu0 %309
      %311 = vadd.xlane.f32.xlu0 %v285
      %v312 = vpop.xlane.xlu0 %311
      %313 = vadd.xlane.f32.xlu0 %v286
      %v314 = vpop.xlane.xlu0 %313
      %315 = vadd.xlane.f32.xlu0 %v287
      %v316 = vpop.xlane.xlu0 %315
      %317 = vadd.xlane.f32.xlu0 %v288
      %v318 = vpop.xlane.xlu0 %317
      %319 = vadd.xlane.f32.xlu0 %v289
      %v320 = vpop.xlane.xlu0 %319
      %321 = vadd.xlane.f32.xlu0 %v290
      %v322 = vpop.xlane.xlu0 %321
      %v323 = vmax.f32 %v292, 1e-16
      %v324 = vmax.f32 %v294, 1e-16
      %v325 = vmax.f32 %v296, 1e-16
      %v326 = vmax.f32 %v298, 1e-16
      %v327 = vmax.f32 %v300, 1e-16
      %v328 = vmax.f32 %v302, 1e-16
      %v329 = vmax.f32 %v304, 1e-16
      %v330 = vmax.f32 %v306, 1e-16
      %v331 = vmax.f32 %v308, 1e-16
      %v332 = vmax.f32 %v310, 1e-16
      %v333 = vmax.f32 %v312, 1e-16
      %v334 = vmax.f32 %v314, 1e-16
      %v335 = vmax.f32 %v316, 1e-16
      %v336 = vmax.f32 %v318, 1e-16
      %v337 = vmax.f32 %v320, 1e-16
      %v338 = vmax.f32 %v322, 1e-16
      %v339 = vrsqrt.pop %v323
      %v340 = vmul.f32 %v339, %v323
      %v341 = vmul.f32 %v340, %v339
      %v342 = vmul.f32 0.5, %v341
      %v343 = vsub.f32 1.5, %v342
      %v344 = vmul.f32 %v339, %v343
      %vm345 = vweird.f32 %v323
      %vm346 = vweird.f32 %v339
      %vm347 = vmor %vm345, %vm346
      %v348 = vsel %vm347, %v339, %v344
      %v349 = vrsqrt.pop %v324
      %v350 = vmul.f32 %v349, %v324
      %v351 = vmul.f32 %v350, %v349
      %v352 = vmul.f32 0.5, %v351
      %v353 = vsub.f32 1.5, %v352
      %v354 = vmul.f32 %v349, %v353
      %vm355 = vweird.f32 %v324
      %vm356 = vweird.f32 %v349
      %vm357 = vmor %vm355, %vm356
      %v358 = vsel %vm357, %v349, %v354
      %v359 = vrsqrt.pop %v325
      %v360 = vmul.f32 %v359, %v325
      %v361 = vmul.f32 %v360, %v359
      %v362 = vmul.f32 0.5, %v361
      %v363 = vsub.f32 1.5, %v362
      %v364 = vmul.f32 %v359, %v363
      %vm365 = vweird.f32 %v325
      %vm366 = vweird.f32 %v359
      %vm367 = vmor %vm365, %vm366
      %v368 = vsel %vm367, %v359, %v364
      %v369 = vrsqrt.pop %v326
      %v370 = vmul.f32 %v369, %v326
      %v371 = vmul.f32 %v370, %v369
      %v372 = vmul.f32 0.5, %v371
      %v373 = vsub.f32 1.5, %v372
      %v374 = vmul.f32 %v369, %v373
      %vm375 = vweird.f32 %v326
      %vm376 = vweird.f32 %v369
      %vm377 = vmor %vm375, %vm376
      %v378 = vsel %vm377, %v369, %v374
      %v379 = vrsqrt.pop %v327
      %v380 = vmul.f32 %v379, %v327
      %v381 = vmul.f32 %v380, %v379
      %v382 = vmul.f32 0.5, %v381
      %v383 = vsub.f32 1.5, %v382
      %v384 = vmul.f32 %v379, %v383
      %vm385 = vweird.f32 %v327
      %vm386 = vweird.f32 %v379
      %vm387 = vmor %vm385, %vm386
      %v388 = vsel %vm387, %v379, %v384
      %v389 = vrsqrt.pop %v328
      %v390 = vmul.f32 %v389, %v328
      %v391 = vmul.f32 %v390, %v389
      %v392 = vmul.f32 0.5, %v391
      %v393 = vsub.f32 1.5, %v392
      %v394 = vmul.f32 %v389, %v393
      %vm395 = vweird.f32 %v328
      %vm396 = vweird.f32 %v389
      %vm397 = vmor %vm395, %vm396
      %v398 = vsel %vm397, %v389, %v394
      %v399 = vrsqrt.pop %v329
      %v400 = vmul.f32 %v399, %v329
      %v401 = vmul.f32 %v400, %v399
      %v402 = vmul.f32 0.5, %v401
      %v403 = vsub.f32 1.5, %v402
      %v404 = vmul.f32 %v399, %v403
      %vm405 = vweird.f32 %v329
      %vm406 = vweird.f32 %v399
      %vm407 = vmor %vm405, %vm406
      %v408 = vsel %vm407, %v399, %v404
      %v409 = vrsqrt.pop %v330
      %v410 = vmul.f32 %v409, %v330
      %v411 = vmul.f32 %v410, %v409
      %v412 = vmul.f32 0.5, %v411
      %v413 = vsub.f32 1.5, %v412
      %v414 = vmul.f32 %v409, %v413
      %vm415 = vweird.f32 %v330
      %vm416 = vweird.f32 %v409
      %vm417 = vmor %vm415, %vm416
      %v418 = vsel %vm417, %v409, %v414
      %v419 = vrsqrt.pop %v331
      %v420 = vmul.f32 %v419, %v331
      %v421 = vmul.f32 %v420, %v419
      %v422 = vmul.f32 0.5, %v421
      %v423 = vsub.f32 1.5, %v422
      %v424 = vmul.f32 %v419, %v423
      %vm425 = vweird.f32 %v331
      %vm426 = vweird.f32 %v419
      %vm427 = vmor %vm425, %vm426
      %v428 = vsel %vm427, %v419, %v424
      %v429 = vrsqrt.pop %v332
      %v430 = vmul.f32 %v429, %v332
      %v431 = vmul.f32 %v430, %v429
      %v432 = vmul.f32 0.5, %v431
      %v433 = vsub.f32 1.5, %v432
      %v434 = vmul.f32 %v429, %v433
      %vm435 = vweird.f32 %v332
      %vm436 = vweird.f32 %v429
      %vm437 = vmor %vm435, %vm436
      %v438 = vsel %vm437, %v429, %v434
      %v439 = vrsqrt.pop %v333
      %v440 = vmul.f32 %v439, %v333
      %v441 = vmul.f32 %v440, %v439
      %v442 = vmul.f32 0.5, %v441
      %v443 = vsub.f32 1.5, %v442
      %v444 = vmul.f32 %v439, %v443
      %vm445 = vweird.f32 %v333
      %vm446 = vweird.f32 %v439
      %vm447 = vmor %vm445, %vm446
      %v448 = vsel %vm447, %v439, %v444
      %v449 = vrsqrt.pop %v334
      %v450 = vmul.f32 %v449, %v334
      %v451 = vmul.f32 %v450, %v449
      %v452 = vmul.f32 0.5, %v451
      %v453 = vsub.f32 1.5, %v452
      %v454 = vmul.f32 %v449, %v453
      %vm455 = vweird.f32 %v334
      %vm456 = vweird.f32 %v449
      %vm457 = vmor %vm455, %vm456
      %v458 = vsel %vm457, %v449, %v454
      %v459 = vrsqrt.pop %v335
      %v460 = vmul.f32 %v459, %v335
      %v461 = vmul.f32 %v460, %v459
      %v462 = vmul.f32 0.5, %v461
      %v463 = vsub.f32 1.5, %v462
      %v464 = vmul.f32 %v459, %v463
      %vm465 = vweird.f32 %v335
      %vm466 = vweird.f32 %v459
      %vm467 = vmor %vm465, %vm466
      %v468 = vsel %vm467, %v459, %v464
      %v469 = vrsqrt.pop %v336
      %v470 = vmul.f32 %v469, %v336
      %v471 = vmul.f32 %v470, %v469
      %v472 = vmul.f32 0.5, %v471
      %v473 = vsub.f32 1.5, %v472
      %v474 = vmul.f32 %v469, %v473
      %vm475 = vweird.f32 %v336
      %vm476 = vweird.f32 %v469
      %vm477 = vmor %vm475, %vm476
      %v478 = vsel %vm477, %v469, %v474
      %v479 = vrsqrt.pop %v337
      %v480 = vmul.f32 %v479, %v337
      %v481 = vmul.f32 %v480, %v479
      %v482 = vmul.f32 0.5, %v481
      %v483 = vsub.f32 1.5, %v482
      %v484 = vmul.f32 %v479, %v483
      %vm485 = vweird.f32 %v337
      %vm486 = vweird.f32 %v479
      %vm487 = vmor %vm485, %vm486
      %v488 = vsel %vm487, %v479, %v484
      %v489 = vrsqrt.pop %v338
      %v490 = vmul.f32 %v489, %v338
      %v491 = vmul.f32 %v490, %v489
      %v492 = vmul.f32 0.5, %v491
      %v493 = vsub.f32 1.5, %v492
      %v494 = vmul.f32 %v489, %v493
      %vm495 = vweird.f32 %v338
      %vm496 = vweird.f32 %v489
      %vm497 = vmor %vm495, %vm496
      %v498 = vsel %vm497, %v489, %v494
      %v499 = vmul.f32 %v236, %v348
      %v500 = vmul.f32 %v238, %v358
      %v501 = vmul.f32 %v241, %v368
      %v502 = vmul.f32 %v243, %v378
      %v503 = vmul.f32 %v246, %v388
      %v504 = vmul.f32 %v248, %v398
      %v505 = vmul.f32 %v251, %v408
      %v506 = vmul.f32 %v253, %v418
      %v507 = vmul.f32 %v256, %v428
      %v508 = vmul.f32 %v258, %v438
      %v509 = vmul.f32 %v261, %v448
      %v510 = vmul.f32 %v263, %v458
      %v511 = vmul.f32 %v266, %v468
      %v512 = vmul.f32 %v268, %v478
      %v513 = vmul.f32 %v271, %v488
      %v514 = vmul.f32 %v273, %v498
      %v515 = vpack.c.bf16 %v499, %v499
      %v516 = vpack.c.bf16 %v500, %v500
      %v517 = vpack.c.bf16 %v501, %v501
      %v518 = vpack.c.bf16 %v502, %v502
      %v519 = vpack.c.bf16 %v503, %v503
      %v520 = vpack.c.bf16 %v504, %v504
      %v521 = vpack.c.bf16 %v505, %v505
      %v522 = vpack.c.bf16 %v506, %v506
      %v523 = vpack.c.bf16 %v507, %v507
      %v524 = vpack.c.bf16 %v508, %v508
      %v525 = vpack.c.bf16 %v509, %v509
      %v526 = vpack.c.bf16 %v510, %v510
      %v527 = vpack.c.bf16 %v511, %v511
      %v528 = vpack.c.bf16 %v512, %v512
      %v529 = vpack.c.bf16 %v513, %v513
      %v530 = vpack.c.bf16 %v514, %v514
      %531 = vst [vmem:[#allocation2] sm:$0xf] %v515
      %532 = vst [vmem:[#allocation2 + $0x4] sm:$0xf] %v516
      %533 = vst [vmem:[#allocation2 + $0x8] sm:$0xf] %v517
      %534 = vst [vmem:[#allocation2 + $0xc] sm:$0xf] %v518
      %535 = vst [vmem:[#allocation2 + $0x10] sm:$0xf] %v519
      %536 = vst [vmem:[#allocation2 + $0x14] sm:$0xf] %v520
      %537 = vst [vmem:[#allocation2 + $0x18] sm:$0xf] %v521
      %538 = vst [vmem:[#allocation2 + $0x1c] sm:$0xf] %v522
      %539 = vst [vmem:[#allocation2 + $0x20] sm:$0xf] %v523
      %540 = vst [vmem:[#allocation2 + $0x24] sm:$0xf] %v524
      %541 = vst [vmem:[#allocation2 + $0x28] sm:$0xf] %v525
      %542 = vst [vmem:[#allocation2 + $0x2c] sm:$0xf] %v526
      %543 = vst [vmem:[#allocation2 + $0x30] sm:$0xf] %v527
      %544 = vst [vmem:[#allocation2 + $0x34] sm:$0xf] %v528
      %545 = vst [vmem:[#allocation2 + $0x38] sm:$0xf] %v529
      %546 = vst [vmem:[#allocation2 + $0x3c] sm:$0xf] %v530
    $region45: #{tpu_custom_call.1} parent=1 // pred_fallthru
      _
    %v547 = vld [vmem:[#allocation8] sm:$0xf]
    %v548 = vld [vmem:[#allocation9] sm:$0xf]
    %v549 = vld [vmem:[#allocation9 + $0x4] sm:$0xf]
    %v550 = vld [vmem:[#allocation9 + $0x8] sm:$0xf]
    %v551 = vld [vmem:[#allocation9 + $0xc] sm:$0xf]
    %v552 = vld [vmem:[#allocation9 + $0x10] sm:$0xf]
    %v553 = vld [vmem:[#allocation9 + $0x14] sm:$0xf]
    %v554 = vld [vmem:[#allocation9 + $0x18] sm:$0xf]
    %v555 = vld [vmem:[#allocation9 + $0x1c] sm:$0xf]
    %v556 = vld [vmem:[#allocation9 + $0x20] sm:$0xf]
    %v557 = vld [vmem:[#allocation9 + $0x24] sm:$0xf]
    %v558 = vld [vmem:[#allocation9 + $0x28] sm:$0xf]
    %v559 = vld [vmem:[#allocation9 + $0x2c] sm:$0xf]
    %v560 = vld [vmem:[#allocation9 + $0x30] sm:$0xf]
    %v561 = vld [vmem:[#allocation9 + $0x34] sm:$0xf]
    %v562 = vld [vmem:[#allocation9 + $0x38] sm:$0xf]
    %v563 = vld [vmem:[#allocation9 + $0x3c] sm:$0xf]
    %v564 = vld [vmem:[%s5] sm:$0x1]
    %v566 = vperm.slane %v564, 0
    %v584 = vunpack.c.l.b16 %v548
    %v585 = vunpack.c.l.b16 %v549
    %v586 = vunpack.c.l.b16 %v550
    %v587 = vunpack.c.l.b16 %v551
    %v588 = vunpack.c.l.b16 %v552
    %v589 = vunpack.c.l.b16 %v553
    %v590 = vunpack.c.l.b16 %v554
    %v591 = vunpack.c.l.b16 %v555
    %v592 = vunpack.c.l.b16 %v556
    %v593 = vunpack.c.l.b16 %v557
    %v594 = vunpack.c.l.b16 %v558
    %v595 = vunpack.c.l.b16 %v559
    %v596 = vunpack.c.l.b16 %v560
    %v597 = vunpack.c.l.b16 %v561
    %v598 = vunpack.c.l.b16 %v562
    %v599 = vunpack.c.l.b16 %v563
    %v600 = vpack.c.b16 %v585, %v584
    %v601 = vpack.c.b16 %v587, %v586
    %v602 = vpack.c.b16 %v589, %v588
    %v603 = vpack.c.b16 %v591, %v590
    %v604 = vpack.c.b16 %v593, %v592
    %v605 = vpack.c.b16 %v595, %v594
    %v606 = vpack.c.b16 %v597, %v596
    %v607 = vpack.c.b16 %v599, %v598
    %616 = vmatpush.bf16.msra.mxu0 %v607
    %617 = vmatpush.bf16.msra.mxu0 %v606
    %618 = vmatpush.bf16.msra.mxu0 %v605
    %619 = vmatpush.bf16.msra.mxu0 %v604
    %620 = vmatpush.bf16.msra.mxu0 %v603
    %621 = vmatpush.bf16.msra.mxu0 %v602
    %622 = vmatpush.bf16.msra.mxu0 %v601
    %623 = vmatpush.bf16.msra.mxu0 %v600
    %624 = vmatmul.bf16.gmra.mxu0 %v547
    %v625 = vpop.f32.mrf.mxu0
    %v626 = vadd.f32 %v566, %v625
    %v627 = vpop.f32.mrf.mxu0
    %628 = vdwg.mxu0
    %v629 = vmul.f32 %v626, %v626
    %630 = vadd.xlane.f32.xlu0 %v629
    %v631 = vpop.xlane.xlu0 %630
    %v632 = vmax.f32 %v631, 1e-16
    %v633 = vrsqrt.pop %v632
    %v634 = vmul.f32 %v633, %v632
    %v635 = vmul.f32 %v634, %v633
    %v636 = vmul.f32 0.5, %v635
    %v637 = vsub.f32 1.5, %v636
    %v638 = vmul.f32 %v633, %v637
    %vm639 = vweird.f32 %v632
    %vm640 = vweird.f32 %v633
    %vm641 = vmor %vm639, %vm640
    %v642 = vsel %vm641, %v633, %v638
    %v643 = vmul.f32 %v626, %v642
    %v644 = vpack.c.bf16 %v643, %v643
    %v645 = vld [vmem:[#allocation2] sm:$0xf]
    %v646 = vld [vmem:[#allocation2 + $0x4] sm:$0xf]
    %v647 = vld [vmem:[#allocation2 + $0x8] sm:$0xf]
    %v648 = vld [vmem:[#allocation2 + $0xc] sm:$0xf]
    %v649 = vld [vmem:[#allocation2 + $0x10] sm:$0xf]
    %v650 = vld [vmem:[#allocation2 + $0x14] sm:$0xf]
    %v651 = vld [vmem:[#allocation2 + $0x18] sm:$0xf]
    %v652 = vld [vmem:[#allocation2 + $0x1c] sm:$0xf]
    %v653 = vld [vmem:[#allocation2 + $0x20] sm:$0xf]
    %v654 = vld [vmem:[#allocation2 + $0x24] sm:$0xf]
    %v655 = vld [vmem:[#allocation2 + $0x28] sm:$0xf]
    %v656 = vld [vmem:[#allocation2 + $0x2c] sm:$0xf]
    %v657 = vld [vmem:[#allocation2 + $0x30] sm:$0xf]
    %v658 = vld [vmem:[#allocation2 + $0x34] sm:$0xf]
    %v659 = vld [vmem:[#allocation2 + $0x38] sm:$0xf]
    %v660 = vld [vmem:[#allocation2 + $0x3c] sm:$0xf]
    %v677 = vunpack.c.l.b16 %v645
    %v678 = vunpack.c.l.b16 %v646
    %v679 = vunpack.c.l.b16 %v647
    %v680 = vunpack.c.l.b16 %v648
    %v681 = vunpack.c.l.b16 %v649
    %v682 = vunpack.c.l.b16 %v650
    %v683 = vunpack.c.l.b16 %v651
    %v684 = vunpack.c.l.b16 %v652
    %v685 = vunpack.c.l.b16 %v653
    %v686 = vunpack.c.l.b16 %v654
    %v687 = vunpack.c.l.b16 %v655
    %v688 = vunpack.c.l.b16 %v656
    %v689 = vunpack.c.l.b16 %v657
    %v690 = vunpack.c.l.b16 %v658
    %v691 = vunpack.c.l.b16 %v659
    %v692 = vunpack.c.l.b16 %v660
    %v693 = vpack.c.b16 %v678, %v677
    %v694 = vpack.c.b16 %v680, %v679
    %v695 = vpack.c.b16 %v682, %v681
    %v696 = vpack.c.b16 %v684, %v683
    %v697 = vpack.c.b16 %v686, %v685
    %v698 = vpack.c.b16 %v688, %v687
    %v699 = vpack.c.b16 %v690, %v689
    %v700 = vpack.c.b16 %v692, %v691
    %709 = vmatpush.bf16.xpose.msra.mxu0 %v700
    %710 = vmatpush.bf16.xpose.msra.mxu0 %v699
    %711 = vmatpush.bf16.xpose.msra.mxu0 %v698
    %712 = vmatpush.bf16.xpose.msra.mxu0 %v697
    %713 = vmatpush.bf16.xpose.msra.mxu0 %v696
    %714 = vmatpush.bf16.xpose.msra.mxu0 %v695
    %715 = vmatpush.bf16.xpose.msra.mxu0 %v694
    %716 = vmatpush.bf16.xpose.msra.mxu0 %v693
    %717 = vmatmul.bf16.gmra.mxu0 %v644
    %v718 = vpop.f32.mrf.mxu0
    %v719 = vadd.f32 0.0, %v718
    %v720 = vpop.f32.mrf.mxu0
    %721 = vdwg.mxu0
    %v722 = vmul.f32 %v719, 0.5
    %v723 = vlaneseq
    %v724 = vand.u32 %v723, 127
    %vm725 = vcmp.lt.s32.totalorder %v724, 4
    %v726 = vsel %vm725, %v722, -inf
    %727 = vmax.xlane.f32.xlu0 %v726
    %v728 = vpop.xlane.xlu0 %727
    %v729 = vsub.f32 %v726, %v728
    %v730 = vmul.f32 %v729, 1.442695
    %v731 = vpow.pop %v730
    %732 = vadd.xlane.f32.xlu0 %v731
    %v733 = vpop.xlane.xlu0 %732
    %v734 = vrcp.pop %v733
    %v735 = vmul.f32 %v731, %v734
    %v736 = vpack.c.bf16 %v735, %v735
    %737 = vst [vmem:[#allocation11] sm:$0xf] %v736
    // Predicated region
    $region46: #{tpu_custom_call.1} parent=1 // pred_check
      _
    $region47: #{tpu_custom_call.1} parent=1 // pred_check_branch
      %739 = sbr.rel (0) target = $region49
    $region48: #{tpu_custom_call.1} parent=1 // pred_region
      %s740 = sadd.s32 0, 0
      %742 = vsyncadd [#allocation5], 0
      %s743 = smul.addr %s740, 4
      %s744 = scalar_lea.hbm %s6, %s743
      %s746 = sshll.u32 [#allocation11], 4
      %s747 = int_to_ptr.vmem [resolvable:$true] %s746
      %s748 = sshll.u32 %s744, 4
      %s749 = int_to_ptr.hbm [resolvable:$true] %s748
      %751 = dma.vmem_to_hbm [thread:$0]  %s747, 64, %s749, [#allocation5]
    $region49: #{tpu_custom_call.1} parent=1 // pred_fallthru
      _
    // Predicated region
    $region50: #{tpu_custom_call.1} parent=1 // pred_check
      _
    $region51: #{tpu_custom_call.1} parent=1 // pred_check_branch
      %753 = sbr.rel (0) target = $region53
    $region52: #{tpu_custom_call.1} parent=1 // pred_region
      %755 = dma.done [#allocation5], 64
    $region53: #{tpu_custom_call.1} parent=1 // pred_fallthru
      _
    %756 = vsyncpa [#allocation4], 1
    %757 = vsyncpa [#allocation7], 1
    %758 = vsyncpa [#allocation10], 1
    %759 = vsyncpa [#allocation5], 1

</llo_original>
